<compile_context>
chip_gen: v6e
topology: v6e:2x2x1
jax: 0.10.0
libtpu: 0.0.40
codegen_flags: <defaults>
</compile_context>

<pallas_src>
import jax
import jax.numpy as jnp
from jax import lax
from jax.experimental import pallas as pl
from jax.experimental.pallas import tpu as pltpu

# ---- args (mirrors the PyTorch module's constructor arguments) ----
N_FEATURES = 4          # args.n_features
N_HANDCRAFTED = 3       # args.n_handcrafted_features
USE_HANDCRAFT = 1       # args.use_handcraft
N_HIDDEN = 32           # args.n_hidden
N_RNN_LAYERS = 1        # args.n_rnn_layers
DIRECTIONS = 1          # args.rnn_directions (bidirectional=False)
N_ACTION = 1            # args.n_action

FEAT_DIM = N_HIDDEN * N_RNN_LAYERS * DIRECTIONS + N_HANDCRAFTED * USE_HANDCRAFT  # 35
LAST_HIDDEN = FEAT_DIM * 2                                                        # 70
LH_PAD = 128            # MLP hidden width padded to full lane width
BP = 8                  # batch padded to a full sublane tile


def _full_spec(shape):
    """Full-array BlockSpec for a grid-less pallas_call."""
    zeros = (0,) * len(shape)
    return pl.BlockSpec(shape, lambda: zeros)


# ---------------------------------------------------------------------------
# Fused kernel: LSTM recurrence + ValueModule MLP.
# ---------------------------------------------------------------------------
def fused_value_kernel(s_ref, feat_ref, wih_ref, bias_ref, whh_ref,
                       ga_ref, gb_ref, w1l_ref, w1f_ref, b1_ref,
                       w2_ref, b2_ref, w3_ref, b3_ref, w4_ref, b4_ref,
                       out_ref):
    # s_ref   : (T*BP, F)  time-major, batch padded to 8 sublanes
    # feat_ref: (BP, NH)   handcrafted features (padded rows are zero)
    # wih_ref : (F, 4H)    W_ih^T, i/f/o columns pre-scaled by 0.5
    # whh_ref : (H, 4H)    W_hh^T, i/f/o columns pre-scaled by 0.5
    # bias_ref: (1, 4H)    (b_ih + b_hh), i/f/o lanes pre-scaled by 0.5
    # ga/gb   : (1, 4H)    per-lane affine: act = tanh(gates)*ga + gb
    # w1l/w1f : fc1 weight split between LSTM-hidden and handcrafted inputs,
    #           output dim zero-padded to LH_PAD; w2/w3/w4 padded likewise.
    bp = out_ref.shape[0]
    T = s_ref.shape[0] // bp
    H = whh_ref.shape[0]
    F = s_ref.shape[1]
    NH = feat_ref.shape[1]

    # ---- input projection hoisted out of the recurrence.  K = F = 4, so do
    #      it as VPU broadcast multiply-adds instead of an MXU push/pop. ----
    gx = s_ref[:, 0:1] * wih_ref[0:1, :] + bias_ref[...]            # (T*BP, 4H)
    for k in range(1, F):
        gx = gx + s_ref[:, k:k + 1] * wih_ref[k:k + 1, :]

    ga = ga_ref[...]
    gb = gb_ref[...]
    whh = whh_ref[...]
    h = jnp.zeros((bp, H), jnp.float32)
    c = jnp.zeros((bp, H), jnp.float32)

    for t in range(T):  # static unroll (T is small and fixed)
        gates = gx[t * bp:(t + 1) * bp, :] + jnp.dot(
            h, whh, preferred_element_type=jnp.float32)             # (BP, 4H)
        act = jnp.tanh(gates) * ga + gb   # sigmoid (i,f,o) / tanh (g) per lane
        i = act[:, 0 * H:1 * H]
        f = act[:, 1 * H:2 * H]
        g = act[:, 2 * H:3 * H]
        o = act[:, 3 * H:4 * H]
        c = f * c + i * g
        h = o * jnp.tanh(c)

    # ---- ValueModule MLP; the concat is absorbed by the split fc1 weight.
    #      feat @ W1_feat has K = 3 -> VPU broadcast multiply-adds. ----
    f2 = feat_ref[...]                                              # (BP, NH)
    hf = f2[:, 0:1] * w1f_ref[0:1, :] + b1_ref[...]                 # (BP, LH_PAD)
    for k in range(1, NH):
        hf = hf + f2[:, k:k + 1] * w1f_ref[k:k + 1, :]

    h1 = jnp.maximum(
        jnp.dot(h, w1l_ref[...], preferred_element_type=jnp.float32) + hf, 0.0)
    h2 = jnp.maximum(
        jnp.dot(h1, w2_ref[...], preferred_element_type=jnp.float32)
        + b2_ref[...], 0.0)
    h3 = jnp.maximum(
        jnp.dot(h2, w3_ref[...], preferred_element_type=jnp.float32)
        + b3_ref[...], 0.0)
    # Lane-dense, full-tile store; the wrapper slices [:B, :N_ACTION].
    out_ref[...] = (jnp.dot(h3, w4_ref[...], preferred_element_type=jnp.float32)
                    + b4_ref[...])                                  # (BP, LH_PAD)


# ---------------------------------------------------------------------------
# One-time parameter preparation (transposes, bias fold, gate scaling, padding).
# ---------------------------------------------------------------------------
def prepare_params(params):
    def pad_to(a, rows, cols):
        a = jnp.asarray(a, jnp.float32)
        return jnp.zeros((rows, cols), jnp.float32).at[:a.shape[0], :a.shape[1]].set(a)

    w_ih, w_hh, b_ih, b_hh = params["lstm"]
    H = w_hh.shape[1]

    # Gate-lane scaling: sigmoid(x) = 0.5*(1 + tanh(x/2)) -> pre-scale i/f/o
    # columns by 0.5 and post-apply act = tanh(.)*ga + gb.
    lane = jnp.arange(4 * H)
    is_g = (lane >= 2 * H) & (lane < 3 * H)                         # g-gate lanes
    scale = jnp.where(is_g, 1.0, 0.5).astype(jnp.float32).reshape(1, 4 * H)
    gate_a = scale                                                   # 0.5 | 1.0
    gate_b = (1.0 - scale).astype(jnp.float32)                       # 0.5 | 0.0

    wih_t = jnp.transpose(w_ih).astype(jnp.float32) * scale          # (F, 4H)
    whh_t = jnp.transpose(w_hh).astype(jnp.float32) * scale          # (H, 4H)
    bias = (b_ih + b_hh).reshape(1, 4 * H).astype(jnp.float32) * scale

    w1, b1 = params["fc1"]
    w1t = jnp.transpose(w1).astype(jnp.float32)                      # (FEAT_DIM, LH)
    w1l = pad_to(w1t[:N_HIDDEN, :], N_HIDDEN, LH_PAD)                # (H, LH_PAD)
    w1f = pad_to(w1t[N_HIDDEN:, :], N_HANDCRAFTED, LH_PAD)           # (NH, LH_PAD)
    b1p = pad_to(b1.reshape(1, -1), 1, LH_PAD)

    w2, b2 = params["fc2"]
    w2p = pad_to(jnp.transpose(w2), LH_PAD, LH_PAD)
    b2p = pad_to(b2.reshape(1, -1), 1, LH_PAD)

    w3, b3 = params["fc3"]
    w3p = pad_to(jnp.transpose(w3), LH_PAD, LH_PAD)
    b3p = pad_to(b3.reshape(1, -1), 1, LH_PAD)

    w4, b4 = params["val"]
    w4p = pad_to(jnp.transpose(w4), LH_PAD, LH_PAD)                  # only col 0 nonzero
    b4p = pad_to(b4.reshape(1, -1), 1, LH_PAD)

    return (wih_t, bias, whh_t, gate_a, gate_b,
            w1l, w1f, b1p, w2p, b2p, w3p, b3p, w4p, b4p)


# ---------------------------------------------------------------------------
# Full ValueNetwork forward (mode='batch'), single fused pallas_call.
# ---------------------------------------------------------------------------
@jax.jit
def value_network_forward(s, feat, prepped):
    B, T, F = s.shape
    # Time-major flatten, batch zero-padded to 8 sublanes (tiny, fused under jit).
    s_tm = jnp.transpose(s, (1, 0, 2)).astype(jnp.float32)           # (T, B, F)
    s2d = jnp.zeros((T, BP, F), jnp.float32).at[:, :B, :].set(s_tm).reshape(T * BP, F)
    feat2d = jnp.zeros((BP, N_HANDCRAFTED), jnp.float32).at[:B, :].set(
        feat[:, 0, :].astype(jnp.float32))

    args = (s2d, feat2d) + tuple(prepped)
    in_specs = [_full_spec(a.shape) for a in args]
    out = pl.pallas_call(
        fused_value_kernel,
        out_shape=jax.ShapeDtypeStruct((BP, LH_PAD), jnp.float32),   # lane-dense
        in_specs=in_specs,
        out_specs=_full_spec((BP, LH_PAD)),
    )(*args)
    # Padded rows/lanes carry garbage-but-finite values; slice, never reduce.
    return out[:B, :N_ACTION]


# ---------------------------------------------------------------------------
# Pure-JAX reference (for correctness check)
# ---------------------------------------------------------------------------
def reference_forward(s, feat, params):
    w_ih, w_hh, b_ih, b_hh = params["lstm"]
    B, T, F = s.shape
    H = w_hh.shape[1]

    def step(carry, x_t):
        h, c = carry
        gates = x_t @ w_ih.T + h @ w_hh.T + b_ih + b_hh
        i, f, g, o = jnp.split(gates, 4, axis=1)
        i, f, o = jax.nn.sigmoid(i), jax.nn.sigmoid(f), jax.nn.sigmoid(o)
        g = jnp.tanh(g)
        c = f * c + i * g
        h = o * jnp.tanh(c)
        return (h, c), None

    (h, _), _ = lax.scan(step,
                         (jnp.zeros((B, H), jnp.float32), jnp.zeros((B, H), jnp.float32)),
                         jnp.transpose(s, (1, 0, 2)))
    x = jnp.concatenate([h, jnp.squeeze(feat, axis=1)], axis=1)
    for name in ("fc1", "fc2", "fc3"):
        w, b = params[name]
        x = jax.nn.relu(x @ w.T + b)
    w, b = params["val"]
    return x @ w.T + b


# ---------------------------------------------------------------------------
# Deterministic parameter init (PyTorch-style uniform(-1/sqrt(n), 1/sqrt(n)))
# ---------------------------------------------------------------------------
def init_params(key):
    ks = list(jax.random.split(key, 12))

    def unif(k, shape, bound):
        return jax.random.uniform(k, shape, jnp.float32, -bound, bound)

    kl = 1.0 / jnp.sqrt(N_HIDDEN)
    lstm = (unif(ks[0], (4 * N_HIDDEN, N_FEATURES), kl),   # weight_ih_l0
            unif(ks[1], (4 * N_HIDDEN, N_HIDDEN), kl),     # weight_hh_l0
            unif(ks[2], (4 * N_HIDDEN,), kl),              # bias_ih_l0
            unif(ks[3], (4 * N_HIDDEN,), kl))              # bias_hh_l0

    def linear(kw, kb, out_dim, in_dim):
        b = 1.0 / jnp.sqrt(in_dim)
        return (unif(kw, (out_dim, in_dim), b), unif(kb, (out_dim,), b))

    return {
        "lstm": lstm,
        "fc1": linear(ks[4], ks[5], LAST_HIDDEN, FEAT_DIM),
        "fc2": linear(ks[6], ks[7], LAST_HIDDEN, LAST_HIDDEN),
        "fc3": linear(ks[8], ks[9], LAST_HIDDEN, LAST_HIDDEN),
        "val": linear(ks[10], ks[11], N_ACTION, LAST_HIDDEN),
    }


if __name__ == "__main__":
    key = jax.random.PRNGKey(0)
    k_s, k_f, k_p = jax.random.split(key, 3)

    B, T = 2, 8
    s = jax.random.normal(k_s, (B, T, N_FEATURES), jnp.float32)        # (B, T, n_features)
    feat = jax.random.normal(k_f, (B, 1, N_HANDCRAFTED), jnp.float32)  # (B, 1, n_handcrafted)
    params = init_params(k_p)

    prepped = prepare_params(params)                                    # one-time prep
    value = jax.block_until_ready(value_network_forward(s, feat, prepped))

    ref = jax.block_until_ready(reference_forward(s, feat, params))
    assert value.shape == (B, N_ACTION)
    assert jnp.allclose(value, ref, atol=1e-4, rtol=1e-4), (value, ref)

    print("KERNEL_OK")
</pallas_src>

<mosaic_0001>
module attributes {stable_mosaic.version = 11 : i64} {
  func.func @fused_value_kernel(%arg0: memref<64x4xf32, #tpu.memory_space<vmem>>, %arg1: memref<8x3xf32, #tpu.memory_space<vmem>>, %arg2: memref<4x128xf32, #tpu.memory_space<vmem>>, %arg3: memref<1x128xf32, #tpu.memory_space<vmem>>, %arg4: memref<32x128xf32, #tpu.memory_space<vmem>>, %arg5: memref<1x128xf32, #tpu.memory_space<vmem>>, %arg6: memref<1x128xf32, #tpu.memory_space<vmem>>, %arg7: memref<32x128xf32, #tpu.memory_space<vmem>>, %arg8: memref<3x128xf32, #tpu.memory_space<vmem>>, %arg9: memref<1x128xf32, #tpu.memory_space<vmem>>, %arg10: memref<128x128xf32, #tpu.memory_space<vmem>>, %arg11: memref<1x128xf32, #tpu.memory_space<vmem>>, %arg12: memref<128x128xf32, #tpu.memory_space<vmem>>, %arg13: memref<1x128xf32, #tpu.memory_space<vmem>>, %arg14: memref<128x128xf32, #tpu.memory_space<vmem>>, %arg15: memref<1x128xf32, #tpu.memory_space<vmem>>, %arg16: memref<8x128xf32, #tpu.memory_space<vmem>>) attributes {dimension_semantics = [], scalar_prefetch = 0 : i64, scratch_operands = 0 : i64, tpu.core_type = #tpu.core_type<tc>} {
    %c0 = arith.constant 0 : index
    %c0_0 = arith.constant 0 : index
    %0 = vector.load %arg0[%c0, %c0_0] : memref<64x4xf32, #tpu.memory_space<vmem>>, vector<64x1xf32>
    %c0_1 = arith.constant 0 : index
    %c0_2 = arith.constant 0 : index
    %1 = vector.load %arg2[%c0_1, %c0_2] : memref<4x128xf32, #tpu.memory_space<vmem>>, vector<1x128xf32>
    %2 = vector.broadcast %0 : vector<64x1xf32> to vector<64x128xf32>
    %3 = vector.broadcast %1 : vector<1x128xf32> to vector<64x128xf32>
    %4 = arith.mulf %2, %3 : vector<64x128xf32>
    %c0_3 = arith.constant 0 : index
    %c0_4 = arith.constant 0 : index
    %5 = vector.load %arg3[%c0_3, %c0_4] : memref<1x128xf32, #tpu.memory_space<vmem>>, vector<1x128xf32>
    %6 = vector.broadcast %5 : vector<1x128xf32> to vector<64x128xf32>
    %7 = arith.addf %4, %6 : vector<64x128xf32>
    %c0_5 = arith.constant 0 : index
    %c1 = arith.constant 1 : index
    %8 = vector.load %arg0[%c0_5, %c1] : memref<64x4xf32, #tpu.memory_space<vmem>>, vector<64x1xf32>
    %c1_6 = arith.constant 1 : index
    %c0_7 = arith.constant 0 : index
    %9 = vector.load %arg2[%c1_6, %c0_7] : memref<4x128xf32, #tpu.memory_space<vmem>>, vector<1x128xf32>
    %10 = vector.broadcast %8 : vector<64x1xf32> to vector<64x128xf32>
    %11 = vector.broadcast %9 : vector<1x128xf32> to vector<64x128xf32>
    %12 = arith.mulf %10, %11 : vector<64x128xf32>
    %13 = arith.addf %7, %12 : vector<64x128xf32>
    %c0_8 = arith.constant 0 : index
    %c2 = arith.constant 2 : index
    %14 = vector.load %arg0[%c0_8, %c2] : memref<64x4xf32, #tpu.memory_space<vmem>>, vector<64x1xf32>
    %c2_9 = arith.constant 2 : index
    %c0_10 = arith.constant 0 : index
    %15 = vector.load %arg2[%c2_9, %c0_10] : memref<4x128xf32, #tpu.memory_space<vmem>>, vector<1x128xf32>
    %16 = vector.broadcast %14 : vector<64x1xf32> to vector<64x128xf32>
    %17 = vector.broadcast %15 : vector<1x128xf32> to vector<64x128xf32>
    %18 = arith.mulf %16, %17 : vector<64x128xf32>
    %19 = arith.addf %13, %18 : vector<64x128xf32>
    %c0_11 = arith.constant 0 : index
    %c3 = arith.constant 3 : index
    %20 = vector.load %arg0[%c0_11, %c3] : memref<64x4xf32, #tpu.memory_space<vmem>>, vector<64x1xf32>
    %c3_12 = arith.constant 3 : index
    %c0_13 = arith.constant 0 : index
    %21 = vector.load %arg2[%c3_12, %c0_13] : memref<4x128xf32, #tpu.memory_space<vmem>>, vector<1x128xf32>
    %22 = vector.broadcast %20 : vector<64x1xf32> to vector<64x128xf32>
    %23 = vector.broadcast %21 : vector<1x128xf32> to vector<64x128xf32>
    %24 = arith.mulf %22, %23 : vector<64x128xf32>
    %25 = arith.addf %19, %24 : vector<64x128xf32>
    %c0_14 = arith.constant 0 : index
    %c0_15 = arith.constant 0 : index
    %26 = vector.load %arg5[%c0_14, %c0_15] : memref<1x128xf32, #tpu.memory_space<vmem>>, vector<1x128xf32>
    %c0_16 = arith.constant 0 : index
    %c0_17 = arith.constant 0 : index
    %27 = vector.load %arg6[%c0_16, %c0_17] : memref<1x128xf32, #tpu.memory_space<vmem>>, vector<1x128xf32>
    %c0_18 = arith.constant 0 : index
    %c0_19 = arith.constant 0 : index
    %28 = vector.load %arg4[%c0_18, %c0_19] : memref<32x128xf32, #tpu.memory_space<vmem>>, vector<32x128xf32>
    %cst = arith.constant 0.000000e+00 : f32
    %29 = vector.broadcast %cst : f32 to vector<8x32xf32>
    %cst_20 = arith.constant 0.000000e+00 : f32
    %30 = vector.broadcast %cst_20 : f32 to vector<8x32xf32>
    %31 = vector.extract_strided_slice %25 {offsets = [0, 0], sizes = [8, 128], strides = [1, 1]} : vector<64x128xf32> to vector<8x128xf32>
    %cst_21 = arith.constant dense<0.000000e+00> : vector<8x128xf32>
    %32 = tpu.matmul %29, %28, %cst_21 {dimension_numbers = #tpu.dot_dimension_numbers<[1], [0], [0], [1], [0, 0, 1, 1], [], []>} : vector<8x32xf32>, vector<32x128xf32>, vector<8x128xf32> -> vector<8x128xf32>
    %33 = arith.addf %31, %32 : vector<8x128xf32>
    %34 = math.tanh %33 : vector<8x128xf32>
    %35 = vector.broadcast %26 : vector<1x128xf32> to vector<8x128xf32>
    %36 = arith.mulf %34, %35 : vector<8x128xf32>
    %37 = vector.broadcast %27 : vector<1x128xf32> to vector<8x128xf32>
    %38 = arith.addf %36, %37 : vector<8x128xf32>
    %39 = vector.extract_strided_slice %38 {offsets = [0, 0], sizes = [8, 32], strides = [1, 1]} : vector<8x128xf32> to vector<8x32xf32>
    %40 = vector.extract_strided_slice %38 {offsets = [0, 32], sizes = [8, 32], strides = [1, 1]} : vector<8x128xf32> to vector<8x32xf32>
    %41 = vector.extract_strided_slice %38 {offsets = [0, 64], sizes = [8, 32], strides = [1, 1]} : vector<8x128xf32> to vector<8x32xf32>
    %42 = vector.extract_strided_slice %38 {offsets = [0, 96], sizes = [8, 32], strides = [1, 1]} : vector<8x128xf32> to vector<8x32xf32>
    %43 = arith.mulf %40, %30 : vector<8x32xf32>
    %44 = arith.mulf %39, %41 : vector<8x32xf32>
    %45 = arith.addf %43, %44 : vector<8x32xf32>
    %46 = math.tanh %45 : vector<8x32xf32>
    %47 = arith.mulf %42, %46 : vector<8x32xf32>
    %48 = vector.extract_strided_slice %25 {offsets = [8, 0], sizes = [8, 128], strides = [1, 1]} : vector<64x128xf32> to vector<8x128xf32>
    %cst_22 = arith.constant dense<0.000000e+00> : vector<8x128xf32>
    %49 = tpu.matmul %47, %28, %cst_22 {dimension_numbers = #tpu.dot_dimension_numbers<[1], [0], [0], [1], [0, 0, 1, 1], [], []>} : vector<8x32xf32>, vector<32x128xf32>, vector<8x128xf32> -> vector<8x128xf32>
    %50 = arith.addf %48, %49 : vector<8x128xf32>
    %51 = math.tanh %50 : vector<8x128xf32>
    %52 = vector.broadcast %26 : vector<1x128xf32> to vector<8x128xf32>
    %53 = arith.mulf %51, %52 : vector<8x128xf32>
    %54 = vector.broadcast %27 : vector<1x128xf32> to vector<8x128xf32>
    %55 = arith.addf %53, %54 : vector<8x128xf32>
    %56 = vector.extract_strided_slice %55 {offsets = [0, 0], sizes = [8, 32], strides = [1, 1]} : vector<8x128xf32> to vector<8x32xf32>
    %57 = vector.extract_strided_slice %55 {offsets = [0, 32], sizes = [8, 32], strides = [1, 1]} : vector<8x128xf32> to vector<8x32xf32>
    %58 = vector.extract_strided_slice %55 {offsets = [0, 64], sizes = [8, 32], strides = [1, 1]} : vector<8x128xf32> to vector<8x32xf32>
    %59 = vector.extract_strided_slice %55 {offsets = [0, 96], sizes = [8, 32], strides = [1, 1]} : vector<8x128xf32> to vector<8x32xf32>
    %60 = arith.mulf %57, %45 : vector<8x32xf32>
    %61 = arith.mulf %56, %58 : vector<8x32xf32>
    %62 = arith.addf %60, %61 : vector<8x32xf32>
    %63 = math.tanh %62 : vector<8x32xf32>
    %64 = arith.mulf %59, %63 : vector<8x32xf32>
    %65 = vector.extract_strided_slice %25 {offsets = [16, 0], sizes = [8, 128], strides = [1, 1]} : vector<64x128xf32> to vector<8x128xf32>
    %cst_23 = arith.constant dense<0.000000e+00> : vector<8x128xf32>
    %66 = tpu.matmul %64, %28, %cst_23 {dimension_numbers = #tpu.dot_dimension_numbers<[1], [0], [0], [1], [0, 0, 1, 1], [], []>} : vector<8x32xf32>, vector<32x128xf32>, vector<8x128xf32> -> vector<8x128xf32>
    %67 = arith.addf %65, %66 : vector<8x128xf32>
    %68 = math.tanh %67 : vector<8x128xf32>
    %69 = vector.broadcast %26 : vector<1x128xf32> to vector<8x128xf32>
    %70 = arith.mulf %68, %69 : vector<8x128xf32>
    %71 = vector.broadcast %27 : vector<1x128xf32> to vector<8x128xf32>
    %72 = arith.addf %70, %71 : vector<8x128xf32>
    %73 = vector.extract_strided_slice %72 {offsets = [0, 0], sizes = [8, 32], strides = [1, 1]} : vector<8x128xf32> to vector<8x32xf32>
    %74 = vector.extract_strided_slice %72 {offsets = [0, 32], sizes = [8, 32], strides = [1, 1]} : vector<8x128xf32> to vector<8x32xf32>
    %75 = vector.extract_strided_slice %72 {offsets = [0, 64], sizes = [8, 32], strides = [1, 1]} : vector<8x128xf32> to vector<8x32xf32>
    %76 = vector.extract_strided_slice %72 {offsets = [0, 96], sizes = [8, 32], strides = [1, 1]} : vector<8x128xf32> to vector<8x32xf32>
    %77 = arith.mulf %74, %62 : vector<8x32xf32>
    %78 = arith.mulf %73, %75 : vector<8x32xf32>
    %79 = arith.addf %77, %78 : vector<8x32xf32>
    %80 = math.tanh %79 : vector<8x32xf32>
    %81 = arith.mulf %76, %80 : vector<8x32xf32>
    %82 = vector.extract_strided_slice %25 {offsets = [24, 0], sizes = [8, 128], strides = [1, 1]} : vector<64x128xf32> to vector<8x128xf32>
    %cst_24 = arith.constant dense<0.000000e+00> : vector<8x128xf32>
    %83 = tpu.matmul %81, %28, %cst_24 {dimension_numbers = #tpu.dot_dimension_numbers<[1], [0], [0], [1], [0, 0, 1, 1], [], []>} : vector<8x32xf32>, vector<32x128xf32>, vector<8x128xf32> -> vector<8x128xf32>
    %84 = arith.addf %82, %83 : vector<8x128xf32>
    %85 = math.tanh %84 : vector<8x128xf32>
    %86 = vector.broadcast %26 : vector<1x128xf32> to vector<8x128xf32>
    %87 = arith.mulf %85, %86 : vector<8x128xf32>
    %88 = vector.broadcast %27 : vector<1x128xf32> to vector<8x128xf32>
    %89 = arith.addf %87, %88 : vector<8x128xf32>
    %90 = vector.extract_strided_slice %89 {offsets = [0, 0], sizes = [8, 32], strides = [1, 1]} : vector<8x128xf32> to vector<8x32xf32>
    %91 = vector.extract_strided_slice %89 {offsets = [0, 32], sizes = [8, 32], strides = [1, 1]} : vector<8x128xf32> to vector<8x32xf32>
    %92 = vector.extract_strided_slice %89 {offsets = [0, 64], sizes = [8, 32], strides = [1, 1]} : vector<8x128xf32> to vector<8x32xf32>
    %93 = vector.extract_strided_slice %89 {offsets = [0, 96], sizes = [8, 32], strides = [1, 1]} : vector<8x128xf32> to vector<8x32xf32>
    %94 = arith.mulf %91, %79 : vector<8x32xf32>
    %95 = arith.mulf %90, %92 : vector<8x32xf32>
    %96 = arith.addf %94, %95 : vector<8x32xf32>
    %97 = math.tanh %96 : vector<8x32xf32>
    %98 = arith.mulf %93, %97 : vector<8x32xf32>
    %99 = vector.extract_strided_slice %25 {offsets = [32, 0], sizes = [8, 128], strides = [1, 1]} : vector<64x128xf32> to vector<8x128xf32>
    %cst_25 = arith.constant dense<0.000000e+00> : vector<8x128xf32>
    %100 = tpu.matmul %98, %28, %cst_25 {dimension_numbers = #tpu.dot_dimension_numbers<[1], [0], [0], [1], [0, 0, 1, 1], [], []>} : vector<8x32xf32>, vector<32x128xf32>, vector<8x128xf32> -> vector<8x128xf32>
    %101 = arith.addf %99, %100 : vector<8x128xf32>
    %102 = math.tanh %101 : vector<8x128xf32>
    %103 = vector.broadcast %26 : vector<1x128xf32> to vector<8x128xf32>
    %104 = arith.mulf %102, %103 : vector<8x128xf32>
    %105 = vector.broadcast %27 : vector<1x128xf32> to vector<8x128xf32>
    %106 = arith.addf %104, %105 : vector<8x128xf32>
    %107 = vector.extract_strided_slice %106 {offsets = [0, 0], sizes = [8, 32], strides = [1, 1]} : vector<8x128xf32> to vector<8x32xf32>
    %108 = vector.extract_strided_slice %106 {offsets = [0, 32], sizes = [8, 32], strides = [1, 1]} : vector<8x128xf32> to vector<8x32xf32>
    %109 = vector.extract_strided_slice %106 {offsets = [0, 64], sizes = [8, 32], strides = [1, 1]} : vector<8x128xf32> to vector<8x32xf32>
    %110 = vector.extract_strided_slice %106 {offsets = [0, 96], sizes = [8, 32], strides = [1, 1]} : vector<8x128xf32> to vector<8x32xf32>
    %111 = arith.mulf %108, %96 : vector<8x32xf32>
    %112 = arith.mulf %107, %109 : vector<8x32xf32>
    %113 = arith.addf %111, %112 : vector<8x32xf32>
    %114 = math.tanh %113 : vector<8x32xf32>
    %115 = arith.mulf %110, %114 : vector<8x32xf32>
    %116 = vector.extract_strided_slice %25 {offsets = [40, 0], sizes = [8, 128], strides = [1, 1]} : vector<64x128xf32> to vector<8x128xf32>
    %cst_26 = arith.constant dense<0.000000e+00> : vector<8x128xf32>
    %117 = tpu.matmul %115, %28, %cst_26 {dimension_numbers = #tpu.dot_dimension_numbers<[1], [0], [0], [1], [0, 0, 1, 1], [], []>} : vector<8x32xf32>, vector<32x128xf32>, vector<8x128xf32> -> vector<8x128xf32>
    %118 = arith.addf %116, %117 : vector<8x128xf32>
    %119 = math.tanh %118 : vector<8x128xf32>
    %120 = vector.broadcast %26 : vector<1x128xf32> to vector<8x128xf32>
    %121 = arith.mulf %119, %120 : vector<8x128xf32>
    %122 = vector.broadcast %27 : vector<1x128xf32> to vector<8x128xf32>
    %123 = arith.addf %121, %122 : vector<8x128xf32>
    %124 = vector.extract_strided_slice %123 {offsets = [0, 0], sizes = [8, 32], strides = [1, 1]} : vector<8x128xf32> to vector<8x32xf32>
    %125 = vector.extract_strided_slice %123 {offsets = [0, 32], sizes = [8, 32], strides = [1, 1]} : vector<8x128xf32> to vector<8x32xf32>
    %126 = vector.extract_strided_slice %123 {offsets = [0, 64], sizes = [8, 32], strides = [1, 1]} : vector<8x128xf32> to vector<8x32xf32>
    %127 = vector.extract_strided_slice %123 {offsets = [0, 96], sizes = [8, 32], strides = [1, 1]} : vector<8x128xf32> to vector<8x32xf32>
    %128 = arith.mulf %125, %113 : vector<8x32xf32>
    %129 = arith.mulf %124, %126 : vector<8x32xf32>
    %130 = arith.addf %128, %129 : vector<8x32xf32>
    %131 = math.tanh %130 : vector<8x32xf32>
    %132 = arith.mulf %127, %131 : vector<8x32xf32>
    %133 = vector.extract_strided_slice %25 {offsets = [48, 0], sizes = [8, 128], strides = [1, 1]} : vector<64x128xf32> to vector<8x128xf32>
    %cst_27 = arith.constant dense<0.000000e+00> : vector<8x128xf32>
    %134 = tpu.matmul %132, %28, %cst_27 {dimension_numbers = #tpu.dot_dimension_numbers<[1], [0], [0], [1], [0, 0, 1, 1], [], []>} : vector<8x32xf32>, vector<32x128xf32>, vector<8x128xf32> -> vector<8x128xf32>
    %135 = arith.addf %133, %134 : vector<8x128xf32>
    %136 = math.tanh %135 : vector<8x128xf32>
    %137 = vector.broadcast %26 : vector<1x128xf32> to vector<8x128xf32>
    %138 = arith.mulf %136, %137 : vector<8x128xf32>
    %139 = vector.broadcast %27 : vector<1x128xf32> to vector<8x128xf32>
    %140 = arith.addf %138, %139 : vector<8x128xf32>
    %141 = vector.extract_strided_slice %140 {offsets = [0, 0], sizes = [8, 32], strides = [1, 1]} : vector<8x128xf32> to vector<8x32xf32>
    %142 = vector.extract_strided_slice %140 {offsets = [0, 32], sizes = [8, 32], strides = [1, 1]} : vector<8x128xf32> to vector<8x32xf32>
    %143 = vector.extract_strided_slice %140 {offsets = [0, 64], sizes = [8, 32], strides = [1, 1]} : vector<8x128xf32> to vector<8x32xf32>
    %144 = vector.extract_strided_slice %140 {offsets = [0, 96], sizes = [8, 32], strides = [1, 1]} : vector<8x128xf32> to vector<8x32xf32>
    %145 = arith.mulf %142, %130 : vector<8x32xf32>
    %146 = arith.mulf %141, %143 : vector<8x32xf32>
    %147 = arith.addf %145, %146 : vector<8x32xf32>
    %148 = math.tanh %147 : vector<8x32xf32>
    %149 = arith.mulf %144, %148 : vector<8x32xf32>
    %150 = vector.extract_strided_slice %25 {offsets = [56, 0], sizes = [8, 128], strides = [1, 1]} : vector<64x128xf32> to vector<8x128xf32>
    %cst_28 = arith.constant dense<0.000000e+00> : vector<8x128xf32>
    %151 = tpu.matmul %149, %28, %cst_28 {dimension_numbers = #tpu.dot_dimension_numbers<[1], [0], [0], [1], [0, 0, 1, 1], [], []>} : vector<8x32xf32>, vector<32x128xf32>, vector<8x128xf32> -> vector<8x128xf32>
    %152 = arith.addf %150, %151 : vector<8x128xf32>
    %153 = math.tanh %152 : vector<8x128xf32>
    %154 = vector.broadcast %26 : vector<1x128xf32> to vector<8x128xf32>
    %155 = arith.mulf %153, %154 : vector<8x128xf32>
    %156 = vector.broadcast %27 : vector<1x128xf32> to vector<8x128xf32>
    %157 = arith.addf %155, %156 : vector<8x128xf32>
    %158 = vector.extract_strided_slice %157 {offsets = [0, 0], sizes = [8, 32], strides = [1, 1]} : vector<8x128xf32> to vector<8x32xf32>
    %159 = vector.extract_strided_slice %157 {offsets = [0, 32], sizes = [8, 32], strides = [1, 1]} : vector<8x128xf32> to vector<8x32xf32>
    %160 = vector.extract_strided_slice %157 {offsets = [0, 64], sizes = [8, 32], strides = [1, 1]} : vector<8x128xf32> to vector<8x32xf32>
    %161 = vector.extract_strided_slice %157 {offsets = [0, 96], sizes = [8, 32], strides = [1, 1]} : vector<8x128xf32> to vector<8x32xf32>
    %162 = arith.mulf %159, %147 : vector<8x32xf32>
    %163 = arith.mulf %158, %160 : vector<8x32xf32>
    %164 = arith.addf %162, %163 : vector<8x32xf32>
    %165 = math.tanh %164 : vector<8x32xf32>
    %166 = arith.mulf %161, %165 : vector<8x32xf32>
    %c0_29 = arith.constant 0 : index
    %c0_30 = arith.constant 0 : index
    %167 = vector.load %arg1[%c0_29, %c0_30] : memref<8x3xf32, #tpu.memory_space<vmem>>, vector<8x3xf32>
    %168 = vector.extract_strided_slice %167 {offsets = [0, 0], sizes = [8, 1], strides = [1, 1]} : vector<8x3xf32> to vector<8x1xf32>
    %c0_31 = arith.constant 0 : index
    %c0_32 = arith.constant 0 : index
    %169 = vector.load %arg8[%c0_31, %c0_32] : memref<3x128xf32, #tpu.memory_space<vmem>>, vector<1x128xf32>
    %170 = vector.broadcast %168 : vector<8x1xf32> to vector<8x128xf32>
    %171 = vector.broadcast %169 : vector<1x128xf32> to vector<8x128xf32>
    %172 = arith.mulf %170, %171 : vector<8x128xf32>
    %c0_33 = arith.constant 0 : index
    %c0_34 = arith.constant 0 : index
    %173 = vector.load %arg9[%c0_33, %c0_34] : memref<1x128xf32, #tpu.memory_space<vmem>>, vector<1x128xf32>
    %174 = vector.broadcast %173 : vector<1x128xf32> to vector<8x128xf32>
    %175 = arith.addf %172, %174 : vector<8x128xf32>
    %176 = vector.extract_strided_slice %167 {offsets = [0, 1], sizes = [8, 1], strides = [1, 1]} : vector<8x3xf32> to vector<8x1xf32>
    %c1_35 = arith.constant 1 : index
    %c0_36 = arith.constant 0 : index
    %177 = vector.load %arg8[%c1_35, %c0_36] : memref<3x128xf32, #tpu.memory_space<vmem>>, vector<1x128xf32>
    %178 = vector.broadcast %176 : vector<8x1xf32> to vector<8x128xf32>
    %179 = vector.broadcast %177 : vector<1x128xf32> to vector<8x128xf32>
    %180 = arith.mulf %178, %179 : vector<8x128xf32>
    %181 = arith.addf %175, %180 : vector<8x128xf32>
    %182 = vector.extract_strided_slice %167 {offsets = [0, 2], sizes = [8, 1], strides = [1, 1]} : vector<8x3xf32> to vector<8x1xf32>
    %c2_37 = arith.constant 2 : index
    %c0_38 = arith.constant 0 : index
    %183 = vector.load %arg8[%c2_37, %c0_38] : memref<3x128xf32, #tpu.memory_space<vmem>>, vector<1x128xf32>
    %184 = vector.broadcast %182 : vector<8x1xf32> to vector<8x128xf32>
    %185 = vector.broadcast %183 : vector<1x128xf32> to vector<8x128xf32>
    %186 = arith.mulf %184, %185 : vector<8x128xf32>
    %187 = arith.addf %181, %186 : vector<8x128xf32>
    %c0_39 = arith.constant 0 : index
    %c0_40 = arith.constant 0 : index
    %188 = vector.load %arg7[%c0_39, %c0_40] : memref<32x128xf32, #tpu.memory_space<vmem>>, vector<32x128xf32>
    %cst_41 = arith.constant dense<0.000000e+00> : vector<8x128xf32>
    %189 = tpu.matmul %166, %188, %cst_41 {dimension_numbers = #tpu.dot_dimension_numbers<[1], [0], [0], [1], [0, 0, 1, 1], [], []>} : vector<8x32xf32>, vector<32x128xf32>, vector<8x128xf32> -> vector<8x128xf32>
    %190 = arith.addf %189, %187 : vector<8x128xf32>
    %cst_42 = arith.constant 0.000000e+00 : f32
    %191 = vector.broadcast %cst_42 : f32 to vector<8x128xf32>
    %192 = arith.maximumf %190, %191 : vector<8x128xf32>
    %c0_43 = arith.constant 0 : index
    %c0_44 = arith.constant 0 : index
    %193 = vector.load %arg10[%c0_43, %c0_44] : memref<128x128xf32, #tpu.memory_space<vmem>>, vector<128x128xf32>
    %cst_45 = arith.constant dense<0.000000e+00> : vector<8x128xf32>
    %194 = tpu.matmul %192, %193, %cst_45 {dimension_numbers = #tpu.dot_dimension_numbers<[1], [0], [0], [1], [0, 0, 1, 1], [], []>} : vector<8x128xf32>, vector<128x128xf32>, vector<8x128xf32> -> vector<8x128xf32>
    %c0_46 = arith.constant 0 : index
    %c0_47 = arith.constant 0 : index
    %195 = vector.load %arg11[%c0_46, %c0_47] : memref<1x128xf32, #tpu.memory_space<vmem>>, vector<1x128xf32>
    %196 = vector.broadcast %195 : vector<1x128xf32> to vector<8x128xf32>
    %197 = arith.addf %194, %196 : vector<8x128xf32>
    %cst_48 = arith.constant 0.000000e+00 : f32
    %198 = vector.broadcast %cst_48 : f32 to vector<8x128xf32>
    %199 = arith.maximumf %197, %198 : vector<8x128xf32>
    %c0_49 = arith.constant 0 : index
    %c0_50 = arith.constant 0 : index
    %200 = vector.load %arg12[%c0_49, %c0_50] : memref<128x128xf32, #tpu.memory_space<vmem>>, vector<128x128xf32>
    %cst_51 = arith.constant dense<0.000000e+00> : vector<8x128xf32>
    %201 = tpu.matmul %199, %200, %cst_51 {dimension_numbers = #tpu.dot_dimension_numbers<[1], [0], [0], [1], [0, 0, 1, 1], [], []>} : vector<8x128xf32>, vector<128x128xf32>, vector<8x128xf32> -> vector<8x128xf32>
    %c0_52 = arith.constant 0 : index
    %c0_53 = arith.constant 0 : index
    %202 = vector.load %arg13[%c0_52, %c0_53] : memref<1x128xf32, #tpu.memory_space<vmem>>, vector<1x128xf32>
    %203 = vector.broadcast %202 : vector<1x128xf32> to vector<8x128xf32>
    %204 = arith.addf %201, %203 : vector<8x128xf32>
    %cst_54 = arith.constant 0.000000e+00 : f32
    %205 = vector.broadcast %cst_54 : f32 to vector<8x128xf32>
    %206 = arith.maximumf %204, %205 : vector<8x128xf32>
    %c0_55 = arith.constant 0 : index
    %c0_56 = arith.constant 0 : index
    %207 = vector.load %arg14[%c0_55, %c0_56] : memref<128x128xf32, #tpu.memory_space<vmem>>, vector<128x128xf32>
    %cst_57 = arith.constant dense<0.000000e+00> : vector<8x128xf32>
    %208 = tpu.matmul %206, %207, %cst_57 {dimension_numbers = #tpu.dot_dimension_numbers<[1], [0], [0], [1], [0, 0, 1, 1], [], []>} : vector<8x128xf32>, vector<128x128xf32>, vector<8x128xf32> -> vector<8x128xf32>
    %c0_58 = arith.constant 0 : index
    %c0_59 = arith.constant 0 : index
    %209 = vector.load %arg15[%c0_58, %c0_59] : memref<1x128xf32, #tpu.memory_space<vmem>>, vector<1x128xf32>
    %210 = vector.broadcast %209 : vector<1x128xf32> to vector<8x128xf32>
    %211 = arith.addf %208, %210 : vector<8x128xf32>
    %c0_60 = arith.constant 0 : index
    %c0_61 = arith.constant 0 : index
    %212 = vector.load %arg16[%c0_60, %c0_61] : memref<8x128xf32, #tpu.memory_space<vmem>>, vector<8x128xf32>
    tpu.vector_store %arg16[%c0_60, %c0_61], %211 {strides = array<i32>} : memref<8x128xf32, #tpu.memory_space<vmem>>, vector<8x128xf32>,
    return
  }
}

</mosaic_0001>

<llo_original>
// kernel: value_network_forward.1
$region0: #{value_network_forward.1}
  #allocation0 [shape = 'u32[]', space=smem, size = 0x4, offset = 0x4, fixed_abs, tag = 'smem constant byte address 0x4 - core index']
  #allocation1 [shape = 'u32[144,128]{1,0:T(1,128)}', space=vmem, size = 0x12000, scoped, tag = 'internal scratch']
  %s0 = inlined_call_operand.vmem [shape: f32[64,4], index: 0, kind: input, shape index: {}]
  %s1 = inlined_call_operand.vmem [shape: f32[8,3], index: 1, kind: input, shape index: {}]
  %s2 = inlined_call_operand.vmem [shape: f32[4,128], index: 2, kind: input, shape index: {}]
  %s3 = inlined_call_operand.hbm [shape: f32[1,128], index: 3, kind: input, shape index: {}]
  %s4 = inlined_call_operand.hbm [shape: f32[32,128], index: 4, kind: input, shape index: {}]
  %s5 = inlined_call_operand.hbm [shape: f32[1,128], index: 5, kind: input, shape index: {}]
  %s6 = inlined_call_operand.hbm [shape: f32[1,128], index: 6, kind: input, shape index: {}]
  %s7 = inlined_call_operand.hbm [shape: f32[32,128], index: 7, kind: input, shape index: {}]
  %s8 = inlined_call_operand.hbm [shape: f32[3,128], index: 8, kind: input, shape index: {}]
  %s9 = inlined_call_operand.hbm [shape: f32[1,128], index: 9, kind: input, shape index: {}]
  %s10 = inlined_call_operand.hbm [shape: f32[128,128], index: 10, kind: input, shape index: {}]
  %s11 = inlined_call_operand.hbm [shape: f32[1,128], index: 11, kind: input, shape index: {}]
  %s12 = inlined_call_operand.vmem [shape: f32[128,128], index: 12, kind: input, shape index: {}]
  %s13 = inlined_call_operand.hbm [shape: f32[1,128], index: 13, kind: input, shape index: {}]
  %s14 = inlined_call_operand.hbm [shape: f32[128,128], index: 14, kind: input, shape index: {}]
  %s15 = inlined_call_operand.hbm [shape: f32[1,128], index: 15, kind: input, shape index: {}]
  %s16 = inlined_call_operand.vmem [shape: f32[8,128], index: 16, kind: output, shape index: {}]
  %s17 = sld [smem:[#allocation0]]
  $region122: #{value_network_forward.1} parent=0
    _
  %s19 = ssub.s32 1, %s17
  %s20 = scalar_select 0, %s19, %s17
  $region1: #{value_network_forward.1} parent=0
    #allocation2 [shape = 'u8[512]{0}', space=vmem, size = 0x400, scoped, tag = 'input window, operand 3, single buffered']
    #allocation3 [shape = 's32[1]{0}', space=sflag, size = 0x4, scoped, tag = 'scoped memory for value_network_forward.1']
    #allocation4 [shape = 'u8[16384]{0}', space=vmem, size = 0x4000, scoped, tag = 'input window, operand 4, single buffered']
    #allocation5 [shape = 's32[1]{0}', space=sflag, size = 0x4, scoped, tag = 'scoped memory for value_network_forward.1']
    #allocation6 [shape = 'u8[512]{0}', space=vmem, size = 0x400, scoped, tag = 'input window, operand 5, single buffered']
    #allocation7 [shape = 'u8[512]{0}', space=vmem, size = 0x400, scoped, tag = 'input window, operand 6, single buffered']
    #allocation8 [shape = 's32[1]{0}', space=sflag, size = 0x4, scoped, tag = 'scoped memory for value_network_forward.1']
    #allocation9 [shape = 'u8[16384]{0}', space=vmem, size = 0x4000, scoped, tag = 'input window, operand 7, single buffered']
    #allocation10 [shape = 'u8[2048]{0}', space=vmem, size = 0x800, scoped, tag = 'input window, operand 8, single buffered']
    #allocation11 [shape = 's32[1]{0}', space=sflag, size = 0x4, scoped, tag = 'scoped memory for value_network_forward.1']
    #allocation12 [shape = 'u8[512]{0}', space=vmem, size = 0x400, scoped, tag = 'input window, operand 9, single buffered']
    #allocation13 [shape = 'u8[65536]{0}', space=vmem, size = 0x10000, scoped, tag = 'input window, operand 10, single buffered']
    #allocation14 [shape = 's32[1]{0}', space=sflag, size = 0x4, scoped, tag = 'scoped memory for value_network_forward.1']
    #allocation15 [shape = 'u8[512]{0}', space=vmem, size = 0x400, scoped, tag = 'input window, operand 11, single buffered']
    #allocation16 [shape = 'u8[512]{0}', space=vmem, size = 0x400, scoped, tag = 'input window, operand 13, single buffered']
    #allocation17 [shape = 's32[1]{0}', space=sflag, size = 0x4, scoped, tag = 'scoped memory for value_network_forward.1']
    #allocation18 [shape = 'u8[65536]{0}', space=vmem, size = 0x10000, scoped, tag = 'input window, operand 14, single buffered']
    #allocation19 [shape = 'u8[512]{0}', space=vmem, size = 0x400, scoped, tag = 'input window, operand 15, single buffered']
    #allocation20 [shape = 's32[1]{0}', space=sflag, size = 0x4, scoped, tag = 'scoped memory for value_network_forward.1']
    %21 = vsyncpa [#allocation3], 0
    %22 = vsyncpa [#allocation5], 0
    %23 = vsyncpa [#allocation8], 0
    %24 = vsyncpa [#allocation11], 0
    %25 = vsyncpa [#allocation14], 0
    %26 = vsyncpa [#allocation17], 0
    %27 = vsyncpa [#allocation20], 0
    // Predicated region
    $region2: #{value_network_forward.1} parent=1 // pred_check
      _
    $region3: #{value_network_forward.1} parent=1 // pred_check_branch
      %29 = sbr.rel (0) target = $region5
    $region4: #{value_network_forward.1} parent=1 // pred_region
      _
    $region5: #{value_network_forward.1} parent=1 // pred_fallthru
      _
    // Predicated region
    $region6: #{value_network_forward.1} parent=1 // pred_check
      _
    $region7: #{value_network_forward.1} parent=1 // pred_check_branch
      %31 = sbr.rel (0) target = $region9
    $region8: #{value_network_forward.1} parent=1 // pred_region
      _
    $region9: #{value_network_forward.1} parent=1 // pred_fallthru
      _
    // Predicated region
    $region10: #{value_network_forward.1} parent=1 // pred_check
      _
    $region11: #{value_network_forward.1} parent=1 // pred_check_branch
      %33 = sbr.rel (0) target = $region13
    $region12: #{value_network_forward.1} parent=1 // pred_region
      _
    $region13: #{value_network_forward.1} parent=1 // pred_fallthru
      _
    // Predicated region
    $region14: #{value_network_forward.1} parent=1 // pred_check
      _
    $region15: #{value_network_forward.1} parent=1 // pred_check_branch
      %35 = sbr.rel (0) target = $region17
    $region16: #{value_network_forward.1} parent=1 // pred_region
      %s37 = ssub.s32 16, 16
      %38 = vsyncadd [#allocation3], %s37
      %s40 = sshll.u32 [#allocation2], 4
      %s41 = int_to_ptr.vmem [resolvable:$true] %s40
      %43 = dma.hbm_to_vmem [thread:$0]  %s3, 16, %s41, [#allocation3]
    $region17: #{value_network_forward.1} parent=1 // pred_fallthru
      _
    // Predicated region
    $region18: #{value_network_forward.1} parent=1 // pred_check
      _
    $region19: #{value_network_forward.1} parent=1 // pred_check_branch
      %45 = sbr.rel (0) target = $region21
    $region20: #{value_network_forward.1} parent=1 // pred_region
      %s47 = ssub.s32 512, 512
      %48 = vsyncadd [#allocation5], %s47
      %s49 = sshll.u32 [#allocation4], 4
      %s50 = int_to_ptr.vmem [resolvable:$true] %s49
      %55 = dma.hbm_to_vmem [thread:$0]  %s4, 512, %s50, [#allocation5], 128, 128, 8
    $region21: #{value_network_forward.1} parent=1 // pred_fallthru
      _
    // Predicated region
    $region22: #{value_network_forward.1} parent=1 // pred_check
      _
    $region23: #{value_network_forward.1} parent=1 // pred_check_branch
      %57 = sbr.rel (0) target = $region25
    $region24: #{value_network_forward.1} parent=1 // pred_region
      %s59 = ssub.s32 16, 16
      %60 = vsyncadd [#allocation5], %s59
      %s62 = sshll.u32 [#allocation6], 4
      %s63 = int_to_ptr.vmem [resolvable:$true] %s62
      %65 = dma.hbm_to_vmem [thread:$0]  %s5, 16, %s63, [#allocation5]
    $region25: #{value_network_forward.1} parent=1 // pred_fallthru
      _
    // Predicated region
    $region26: #{value_network_forward.1} parent=1 // pred_check
      _
    $region27: #{value_network_forward.1} parent=1 // pred_check_branch
      %67 = sbr.rel (0) target = $region29
    $region28: #{value_network_forward.1} parent=1 // pred_region
      %s69 = ssub.s32 16, 16
      %70 = vsyncadd [#allocation8], %s69
      %s72 = sshll.u32 [#allocation7], 4
      %s73 = int_to_ptr.vmem [resolvable:$true] %s72
      %75 = dma.hbm_to_vmem [thread:$0]  %s6, 16, %s73, [#allocation8]
    $region29: #{value_network_forward.1} parent=1 // pred_fallthru
      _
    // Predicated region
    $region30: #{value_network_forward.1} parent=1 // pred_check
      _
    $region31: #{value_network_forward.1} parent=1 // pred_check_branch
      %77 = sbr.rel (0) target = $region33
    $region32: #{value_network_forward.1} parent=1 // pred_region
      %s79 = ssub.s32 512, 512
      %80 = vsyncadd [#allocation8], %s79
      %s81 = sshll.u32 [#allocation9], 4
      %s82 = int_to_ptr.vmem [resolvable:$true] %s81
      %87 = dma.hbm_to_vmem [thread:$0]  %s7, 512, %s82, [#allocation8], 128, 128, 8
    $region33: #{value_network_forward.1} parent=1 // pred_fallthru
      _
    // Predicated region
    $region34: #{value_network_forward.1} parent=1 // pred_check
      _
    $region35: #{value_network_forward.1} parent=1 // pred_check_branch
      %89 = sbr.rel (0) target = $region37
    $region36: #{value_network_forward.1} parent=1 // pred_region
      %s91 = ssub.s32 64, 64
      %92 = vsyncadd [#allocation11], %s91
      %s94 = sshll.u32 [#allocation10], 4
      %s95 = int_to_ptr.vmem [resolvable:$true] %s94
      %97 = dma.hbm_to_vmem [thread:$0]  %s8, 64, %s95, [#allocation11]
    $region37: #{value_network_forward.1} parent=1 // pred_fallthru
      _
    // Predicated region
    $region38: #{value_network_forward.1} parent=1 // pred_check
      _
    $region39: #{value_network_forward.1} parent=1 // pred_check_branch
      %99 = sbr.rel (0) target = $region41
    $region40: #{value_network_forward.1} parent=1 // pred_region
      %s101 = ssub.s32 16, 16
      %102 = vsyncadd [#allocation11], %s101
      %s104 = sshll.u32 [#allocation12], 4
      %s105 = int_to_ptr.vmem [resolvable:$true] %s104
      %107 = dma.hbm_to_vmem [thread:$0]  %s9, 16, %s105, [#allocation11]
    $region41: #{value_network_forward.1} parent=1 // pred_fallthru
      _
    // Predicated region
    $region42: #{value_network_forward.1} parent=1 // pred_check
      _
    $region43: #{value_network_forward.1} parent=1 // pred_check_branch
      %109 = sbr.rel (0) target = $region45
    $region44: #{value_network_forward.1} parent=1 // pred_region
      %s111 = ssub.s32 2048, 2048
      %112 = vsyncadd [#allocation14], %s111
      %s113 = sshll.u32 [#allocation13], 4
      %s114 = int_to_ptr.vmem [resolvable:$true] %s113
      %119 = dma.hbm_to_vmem [thread:$0]  %s10, 2048, %s114, [#allocation14], 128, 128, 8
    $region45: #{value_network_forward.1} parent=1 // pred_fallthru
      _
    // Predicated region
    $region46: #{value_network_forward.1} parent=1 // pred_check
      _
    $region47: #{value_network_forward.1} parent=1 // pred_check_branch
      %121 = sbr.rel (0) target = $region49
    $region48: #{value_network_forward.1} parent=1 // pred_region
      %s123 = ssub.s32 16, 16
      %124 = vsyncadd [#allocation14], %s123
      %s126 = sshll.u32 [#allocation15], 4
      %s127 = int_to_ptr.vmem [resolvable:$true] %s126
      %129 = dma.hbm_to_vmem [thread:$0]  %s11, 16, %s127, [#allocation14]
    $region49: #{value_network_forward.1} parent=1 // pred_fallthru
      _
    // Predicated region
    $region50: #{value_network_forward.1} parent=1 // pred_check
      _
    $region51: #{value_network_forward.1} parent=1 // pred_check_branch
      %131 = sbr.rel (0) target = $region53
    $region52: #{value_network_forward.1} parent=1 // pred_region
      _
    $region53: #{value_network_forward.1} parent=1 // pred_fallthru
      _
    // Predicated region
    $region54: #{value_network_forward.1} parent=1 // pred_check
      _
    $region55: #{value_network_forward.1} parent=1 // pred_check_branch
      %133 = sbr.rel (0) target = $region57
    $region56: #{value_network_forward.1} parent=1 // pred_region
      %s135 = ssub.s32 16, 16
      %136 = vsyncadd [#allocation17], %s135
      %s138 = sshll.u32 [#allocation16], 4
      %s139 = int_to_ptr.vmem [resolvable:$true] %s138
      %141 = dma.hbm_to_vmem [thread:$0]  %s13, 16, %s139, [#allocation17]
    $region57: #{value_network_forward.1} parent=1 // pred_fallthru
      _
    // Predicated region
    $region58: #{value_network_forward.1} parent=1 // pred_check
      _
    $region59: #{value_network_forward.1} parent=1 // pred_check_branch
      %143 = sbr.rel (0) target = $region61
    $region60: #{value_network_forward.1} parent=1 // pred_region
      %s145 = ssub.s32 2048, 2048
      %146 = vsyncadd [#allocation17], %s145
      %s147 = sshll.u32 [#allocation18], 4
      %s148 = int_to_ptr.vmem [resolvable:$true] %s147
      %153 = dma.hbm_to_vmem [thread:$0]  %s14, 2048, %s148, [#allocation17], 128, 128, 8
    $region61: #{value_network_forward.1} parent=1 // pred_fallthru
      _
    // Predicated region
    $region62: #{value_network_forward.1} parent=1 // pred_check
      _
    $region63: #{value_network_forward.1} parent=1 // pred_check_branch
      %155 = sbr.rel (0) target = $region65
    $region64: #{value_network_forward.1} parent=1 // pred_region
      %s157 = ssub.s32 16, 16
      %158 = vsyncadd [#allocation20], %s157
      %s160 = sshll.u32 [#allocation19], 4
      %s161 = int_to_ptr.vmem [resolvable:$true] %s160
      %163 = dma.hbm_to_vmem [thread:$0]  %s15, 16, %s161, [#allocation20]
    $region65: #{value_network_forward.1} parent=1 // pred_fallthru
      _
    // Predicated region
    $region66: #{value_network_forward.1} parent=1 // pred_check
      _
    $region67: #{value_network_forward.1} parent=1 // pred_check_branch
      %165 = sbr.rel (0) target = $region69
    $region68: #{value_network_forward.1} parent=1 // pred_region
      %166 = dma.done [#allocation3], 16
    $region69: #{value_network_forward.1} parent=1 // pred_fallthru
      _
    // Predicated region
    $region70: #{value_network_forward.1} parent=1 // pred_check
      _
    $region71: #{value_network_forward.1} parent=1 // pred_check_branch
      %168 = sbr.rel (0) target = $region73
    $region72: #{value_network_forward.1} parent=1 // pred_region
      %169 = dma.done [#allocation5], 512
    $region73: #{value_network_forward.1} parent=1 // pred_fallthru
      _
    // Predicated region
    $region74: #{value_network_forward.1} parent=1 // pred_check
      _
    $region75: #{value_network_forward.1} parent=1 // pred_check_branch
      %171 = sbr.rel (0) target = $region77
    $region76: #{value_network_forward.1} parent=1 // pred_region
      %172 = dma.done [#allocation5], 16
    $region77: #{value_network_forward.1} parent=1 // pred_fallthru
      _
    // Predicated region
    $region78: #{value_network_forward.1} parent=1 // pred_check
      _
    $region79: #{value_network_forward.1} parent=1 // pred_check_branch
      %174 = sbr.rel (0) target = $region81
    $region80: #{value_network_forward.1} parent=1 // pred_region
      %175 = dma.done [#allocation8], 16
    $region81: #{value_network_forward.1} parent=1 // pred_fallthru
      _
    // Predicated region
    $region82: #{value_network_forward.1} parent=1 // pred_check
      _
    $region83: #{value_network_forward.1} parent=1 // pred_check_branch
      %177 = sbr.rel (0) target = $region85
    $region84: #{value_network_forward.1} parent=1 // pred_region
      %178 = dma.done [#allocation8], 512
    $region85: #{value_network_forward.1} parent=1 // pred_fallthru
      _
    // Predicated region
    $region86: #{value_network_forward.1} parent=1 // pred_check
      _
    $region87: #{value_network_forward.1} parent=1 // pred_check_branch
      %180 = sbr.rel (0) target = $region89
    $region88: #{value_network_forward.1} parent=1 // pred_region
      %181 = dma.done [#allocation11], 64
    $region89: #{value_network_forward.1} parent=1 // pred_fallthru
      _
    // Predicated region
    $region90: #{value_network_forward.1} parent=1 // pred_check
      _
    $region91: #{value_network_forward.1} parent=1 // pred_check_branch
      %183 = sbr.rel (0) target = $region93
    $region92: #{value_network_forward.1} parent=1 // pred_region
      %184 = dma.done [#allocation11], 16
    $region93: #{value_network_forward.1} parent=1 // pred_fallthru
      _
    // Predicated region
    $region94: #{value_network_forward.1} parent=1 // pred_check
      _
    $region95: #{value_network_forward.1} parent=1 // pred_check_branch
      %186 = sbr.rel (0) target = $region97
    $region96: #{value_network_forward.1} parent=1 // pred_region
      %187 = dma.done [#allocation14], 2048
    $region97: #{value_network_forward.1} parent=1 // pred_fallthru
      _
    // Predicated region
    $region98: #{value_network_forward.1} parent=1 // pred_check
      _
    $region99: #{value_network_forward.1} parent=1 // pred_check_branch
      %189 = sbr.rel (0) target = $region101
    $region100: #{value_network_forward.1} parent=1 // pred_region
      %190 = dma.done [#allocation14], 16
    $region101: #{value_network_forward.1} parent=1 // pred_fallthru
      _
    // Predicated region
    $region102: #{value_network_forward.1} parent=1 // pred_check
      _
    $region103: #{value_network_forward.1} parent=1 // pred_check_branch
      %192 = sbr.rel (0) target = $region105
    $region104: #{value_network_forward.1} parent=1 // pred_region
      %193 = dma.done [#allocation17], 16
    $region105: #{value_network_forward.1} parent=1 // pred_fallthru
      _
    // Predicated region
    $region106: #{value_network_forward.1} parent=1 // pred_check
      _
    $region107: #{value_network_forward.1} parent=1 // pred_check_branch
      %195 = sbr.rel (0) target = $region109
    $region108: #{value_network_forward.1} parent=1 // pred_region
      %196 = dma.done [#allocation17], 2048
    $region109: #{value_network_forward.1} parent=1 // pred_fallthru
      _
    // Predicated region
    $region110: #{value_network_forward.1} parent=1 // pred_check
      _
    $region111: #{value_network_forward.1} parent=1 // pred_check_branch
      %198 = sbr.rel (0) target = $region113
    $region112: #{value_network_forward.1} parent=1 // pred_region
      %199 = dma.done [#allocation20], 16
    $region113: #{value_network_forward.1} parent=1 // pred_fallthru
      _
    %v200 = vld [vmem:[%s0] sm:$0xff]
    %v201 = vld [vmem:[%s0 + $0x8] sm:$0xff]
    %v202 = vld [vmem:[%s0 + $0x10] sm:$0xff]
    %v203 = vld [vmem:[%s0 + $0x18] sm:$0xff]
    %v204 = vld [vmem:[%s0 + $0x20] sm:$0xff]
    %v205 = vld [vmem:[%s0 + $0x28] sm:$0xff]
    %v206 = vld [vmem:[%s0 + $0x30] sm:$0xff]
    %v207 = vld [vmem:[%s0 + $0x38] sm:$0xff]
    %v208 = vld [vmem:[%s2] sm:$0x1]
    %210 = vset.pattern.permute.xlu0 0
    %211 = vperm.xlu0 %210, %v200
    %v212 = vpop.permute.xlu0 %211
    %215 = vset.pattern.permute.xlu0 0
    %216 = vperm.xlu0 %215, %v201
    %v217 = vpop.permute.xlu0 %216
    %220 = vset.pattern.permute.xlu0 0
    %221 = vperm.xlu0 %220, %v202
    %v222 = vpop.permute.xlu0 %221
    %225 = vset.pattern.permute.xlu0 0
    %226 = vperm.xlu0 %225, %v203
    %v227 = vpop.permute.xlu0 %226
    %230 = vset.pattern.permute.xlu0 0
    %231 = vperm.xlu0 %230, %v204
    %v232 = vpop.permute.xlu0 %231
    %235 = vset.pattern.permute.xlu0 0
    %236 = vperm.xlu0 %235, %v205
    %v237 = vpop.permute.xlu0 %236
    %240 = vset.pattern.permute.xlu0 0
    %241 = vperm.xlu0 %240, %v206
    %v242 = vpop.permute.xlu0 %241
    %245 = vset.pattern.permute.xlu0 0
    %246 = vperm.xlu0 %245, %v207
    %v247 = vpop.permute.xlu0 %246
    %v249 = vlaneseq
    %v250 = vshrl.u32 %v249, 7
    %v251 = vsub.s32 0, %v250
    %v252 = vrot.slane %v208, %v251
    %v253 = vmul.f32 %v212, %v252
    %v254 = vmul.f32 %v217, %v252
    %v255 = vmul.f32 %v222, %v252
    %v256 = vmul.f32 %v227, %v252
    %v257 = vmul.f32 %v232, %v252
    %v258 = vmul.f32 %v237, %v252
    %v259 = vmul.f32 %v242, %v252
    %v260 = vmul.f32 %v247, %v252
    %v261 = vld [vmem:[#allocation2] sm:$0x1]
    %v263 = vlaneseq
    %v264 = vshrl.u32 %v263, 7
    %v265 = vsub.s32 0, %v264
    %v266 = vrot.slane %v261, %v265
    %v268 = vadd.f32 %v253, %v266
    %v269 = vadd.f32 %v254, %v266
    %v270 = vadd.f32 %v255, %v266
    %v271 = vadd.f32 %v256, %v266
    %v272 = vadd.f32 %v257, %v266
    %v273 = vadd.f32 %v258, %v266
    %v274 = vadd.f32 %v259, %v266
    %v275 = vadd.f32 %v260, %v266
    %v276 = vld [vmem:[%s2 + $0x1] sm:$0x1]
    %277 = vset.pattern.permute.xlu0 1
    %278 = vperm.xlu0 %277, %v200
    %v279 = vpop.permute.xlu0 %278
    %281 = vset.pattern.permute.xlu0 1
    %282 = vperm.xlu0 %281, %v201
    %v283 = vpop.permute.xlu0 %282
    %285 = vset.pattern.permute.xlu0 1
    %286 = vperm.xlu0 %285, %v202
    %v287 = vpop.permute.xlu0 %286
    %289 = vset.pattern.permute.xlu0 1
    %290 = vperm.xlu0 %289, %v203
    %v291 = vpop.permute.xlu0 %290
    %293 = vset.pattern.permute.xlu0 1
    %294 = vperm.xlu0 %293, %v204
    %v295 = vpop.permute.xlu0 %294
    %297 = vset.pattern.permute.xlu0 1
    %298 = vperm.xlu0 %297, %v205
    %v299 = vpop.permute.xlu0 %298
    %301 = vset.pattern.permute.xlu0 1
    %302 = vperm.xlu0 %301, %v206
    %v303 = vpop.permute.xlu0 %302
    %305 = vset.pattern.permute.xlu0 1
    %306 = vperm.xlu0 %305, %v207
    %v307 = vpop.permute.xlu0 %306
    %v309 = vlaneseq
    %v310 = vshrl.u32 %v309, 7
    %v311 = vsub.s32 0, %v310
    %v312 = vrot.slane %v276, %v311
    %v313 = vmul.f32 %v279, %v312
    %v314 = vmul.f32 %v283, %v312
    %v315 = vmul.f32 %v287, %v312
    %v316 = vmul.f32 %v291, %v312
    %v317 = vmul.f32 %v295, %v312
    %v318 = vmul.f32 %v299, %v312
    %v319 = vmul.f32 %v303, %v312
    %v320 = vmul.f32 %v307, %v312
    %v321 = vadd.f32 %v268, %v313
    %v322 = vadd.f32 %v269, %v314
    %v323 = vadd.f32 %v270, %v315
    %v324 = vadd.f32 %v271, %v316
    %v325 = vadd.f32 %v272, %v317
    %v326 = vadd.f32 %v273, %v318
    %v327 = vadd.f32 %v274, %v319
    %v328 = vadd.f32 %v275, %v320
    %v329 = vld [vmem:[%s2 + $0x2] sm:$0x1]
    %330 = vset.pattern.permute.xlu0 2
    %331 = vperm.xlu0 %330, %v200
    %v332 = vpop.permute.xlu0 %331
    %334 = vset.pattern.permute.xlu0 2
    %335 = vperm.xlu0 %334, %v201
    %v336 = vpop.permute.xlu0 %335
    %338 = vset.pattern.permute.xlu0 2
    %339 = vperm.xlu0 %338, %v202
    %v340 = vpop.permute.xlu0 %339
    %342 = vset.pattern.permute.xlu0 2
    %343 = vperm.xlu0 %342, %v203
    %v344 = vpop.permute.xlu0 %343
    %346 = vset.pattern.permute.xlu0 2
    %347 = vperm.xlu0 %346, %v204
    %v348 = vpop.permute.xlu0 %347
    %350 = vset.pattern.permute.xlu0 2
    %351 = vperm.xlu0 %350, %v205
    %v352 = vpop.permute.xlu0 %351
    %354 = vset.pattern.permute.xlu0 2
    %355 = vperm.xlu0 %354, %v206
    %v356 = vpop.permute.xlu0 %355
    %358 = vset.pattern.permute.xlu0 2
    %359 = vperm.xlu0 %358, %v207
    %v360 = vpop.permute.xlu0 %359
    %v362 = vlaneseq
    %v363 = vshrl.u32 %v362, 7
    %v364 = vsub.s32 0, %v363
    %v365 = vrot.slane %v329, %v364
    %v366 = vmul.f32 %v332, %v365
    %v367 = vmul.f32 %v336, %v365
    %v368 = vmul.f32 %v340, %v365
    %v369 = vmul.f32 %v344, %v365
    %v370 = vmul.f32 %v348, %v365
    %v371 = vmul.f32 %v352, %v365
    %v372 = vmul.f32 %v356, %v365
    %v373 = vmul.f32 %v360, %v365
    %v374 = vadd.f32 %v321, %v366
    %v375 = vadd.f32 %v322, %v367
    %v376 = vadd.f32 %v323, %v368
    %v377 = vadd.f32 %v324, %v369
    %v378 = vadd.f32 %v325, %v370
    %v379 = vadd.f32 %v326, %v371
    %v380 = vadd.f32 %v327, %v372
    %v381 = vadd.f32 %v328, %v373
    %v382 = vld [vmem:[%s2 + $0x3] sm:$0x1]
    %383 = vset.pattern.permute.xlu0 3
    %384 = vperm.xlu0 %383, %v200
    %v385 = vpop.permute.xlu0 %384
    %387 = vset.pattern.permute.xlu0 3
    %388 = vperm.xlu0 %387, %v201
    %v389 = vpop.permute.xlu0 %388
    %391 = vset.pattern.permute.xlu0 3
    %392 = vperm.xlu0 %391, %v202
    %v393 = vpop.permute.xlu0 %392
    %395 = vset.pattern.permute.xlu0 3
    %396 = vperm.xlu0 %395, %v203
    %v397 = vpop.permute.xlu0 %396
    %399 = vset.pattern.permute.xlu0 3
    %400 = vperm.xlu0 %399, %v204
    %v401 = vpop.permute.xlu0 %400
    %403 = vset.pattern.permute.xlu0 3
    %404 = vperm.xlu0 %403, %v205
    %v405 = vpop.permute.xlu0 %404
    %407 = vset.pattern.permute.xlu0 3
    %408 = vperm.xlu0 %407, %v206
    %v409 = vpop.permute.xlu0 %408
    %411 = vset.pattern.permute.xlu0 3
    %412 = vperm.xlu0 %411, %v207
    %v413 = vpop.permute.xlu0 %412
    %v415 = vlaneseq
    %v416 = vshrl.u32 %v415, 7
    %v417 = vsub.s32 0, %v416
    %v418 = vrot.slane %v382, %v417
    %v419 = vmul.f32 %v385, %v418
    %v420 = vmul.f32 %v389, %v418
    %v421 = vmul.f32 %v393, %v418
    %v422 = vmul.f32 %v397, %v418
    %v423 = vmul.f32 %v401, %v418
    %v424 = vmul.f32 %v405, %v418
    %v425 = vmul.f32 %v409, %v418
    %v426 = vmul.f32 %v413, %v418
    %v427 = vadd.f32 %v374, %v419
    %v428 = vadd.f32 %v375, %v420
    %v429 = vadd.f32 %v376, %v421
    %v430 = vadd.f32 %v377, %v422
    %v431 = vadd.f32 %v378, %v423
    %v432 = vadd.f32 %v379, %v424
    %v433 = vadd.f32 %v380, %v425
    %v434 = vadd.f32 %v381, %v426
    %v435 = vld [vmem:[#allocation6] sm:$0x1]
    %v436 = vld [vmem:[#allocation7] sm:$0x1]
    %v437 = vld [vmem:[#allocation4] sm:$0xff]
    %v438 = vld [vmem:[#allocation4 + $0x8] sm:$0xff]
    %v439 = vld [vmem:[#allocation4 + $0x10] sm:$0xff]
    %v440 = vld [vmem:[#allocation4 + $0x18] sm:$0xff]
    %vm441 = vcmask 261120
    %v443 = vsel %vm441, 0.0, 0
    %445 = vmatprep.subr.mxu0 0.0
    %446 = vmatpush1.msra.mxu0 0.0
    %447 = vmatprep.subr.mxu0 0.0
    %448 = vmatpush1.msra.mxu0 0.0
    %449 = vmatprep.subr.mxu0 0.0
    %450 = vmatpush1.msra.mxu0 0.0
    %451 = vmatprep.subr.mxu0 0.0
    %452 = vmatpush1.msra.mxu0 0.0
    %453 = vmatprep.subr.mxu0 0.0
    %454 = vmatpush1.msra.mxu0 0.0
    %455 = vmatprep.subr.mxu0 0.0
    %456 = vmatpush1.msra.mxu0 0.0
    %457 = vmatprep.subr.mxu0 0.0
    %458 = vmatpush1.msra.mxu0 0.0
    %459 = vmatprep.subr.mxu0 0.0
    %460 = vmatpush1.msra.mxu0 0.0
    %461 = vmatprep.subr.mxu0 0.0
    %462 = vmatpush1.msra.mxu0 0.0
    %463 = vmatprep.subr.mxu0 0.0
    %464 = vmatpush1.msra.mxu0 0.0
    %465 = vmatprep.subr.mxu0 0.0
    %466 = vmatpush1.msra.mxu0 0.0
    %467 = vmatprep.subr.mxu0 0.0
    %468 = vmatpush1.msra.mxu0 0.0
    %469 = vmatprep.subr.mxu0 0.0
    %470 = vmatpush1.msra.mxu0 %v440
    %471 = vmatprep.subr.mxu0 0.0
    %472 = vmatpush1.msra.mxu0 %v439
    %473 = vmatprep.subr.mxu0 0.0
    %474 = vmatpush1.msra.mxu0 %v438
    %475 = vmatprep.subr.mxu0 0.0
    %476 = vmatpush1.msra.mxu0 %v437
    %477 = vmatprep.subr.mxu0 0.0
    %478 = vmatpush2.msra.mxu0 0.0
    %479 = vmatprep.subr.mxu0 0.0
    %480 = vmatpush2.msra.mxu0 0.0
    %481 = vmatprep.subr.mxu0 0.0
    %482 = vmatpush2.msra.mxu0 0.0
    %483 = vmatprep.subr.mxu0 0.0
    %484 = vmatpush2.msra.mxu0 0.0
    %485 = vmatprep.subr.mxu0 0.0
    %486 = vmatpush2.msra.mxu0 0.0
    %487 = vmatprep.subr.mxu0 0.0
    %488 = vmatpush2.msra.mxu0 0.0
    %489 = vmatprep.subr.mxu0 0.0
    %490 = vmatpush2.msra.mxu0 0.0
    %491 = vmatprep.subr.mxu0 0.0
    %492 = vmatpush2.msra.mxu0 0.0
    %493 = vmatprep.subr.mxu0 0.0
    %494 = vmatpush2.msra.mxu0 0.0
    %495 = vmatprep.subr.mxu0 0.0
    %496 = vmatpush2.msra.mxu0 0.0
    %497 = vmatprep.subr.mxu0 0.0
    %498 = vmatpush2.msra.mxu0 0.0
    %499 = vmatprep.subr.mxu0 0.0
    %500 = vmatpush2.msra.mxu0 0.0
    %501 = vmatprep.subr.mxu0 0.0
    %502 = vmatpush2.msra.mxu0 0.0
    %503 = vmatprep.subr.mxu0 0.0
    %504 = vmatpush2.msra.mxu0 0.0
    %505 = vmatprep.subr.mxu0 0.0
    %506 = vmatpush2.msra.mxu0 0.0
    %507 = vmatprep.subr.mxu0 0.0
    %508 = vmatpush2.msra.mxu0 0.0
    %509 = vmatprep.mubr.f32.mxu0 0.0
    %510 = vmatmul.mubr.f32.gmra.mxu0 %v443
    %v511 = vpop.f32.mrf.mxu0
    %v512 = vadd.f32 0.0, %v511
    %v513 = vpop.f32.mrf.mxu0
    %514 = vdwg.mxu0
    %v515 = vadd.f32 %v427, %v512
    %v516 = vtanh.pop %v515
    %v518 = vlaneseq
    %v519 = vshrl.u32 %v518, 7
    %v520 = vsub.s32 0, %v519
    %v521 = vrot.slane %v435, %v520
    %v523 = vmul.f32 %v516, %v521
    %v525 = vlaneseq
    %v526 = vshrl.u32 %v525, 7
    %v527 = vsub.s32 0, %v526
    %v528 = vrot.slane %v436, %v527
    %v530 = vadd.f32 %v523, %v528
    %v531 = vmul.f32 %v530, 0.0
    %533 = vrot.lane.b32.xlu0 %v530, 64
    %v534 = vpop.permute.xlu0 %533
    %v536 = vmul.f32 %v530, %v534
    %538 = vrot.lane.b32.xlu0 %v536, 32
    %v539 = vpop.permute.xlu0 %538
    %v541 = vadd.f32 %v531, %v539
    %v542 = vtanh.pop %v541
    %544 = vrot.lane.b32.xlu0 %v542, 64
    %v545 = vpop.permute.xlu0 %544
    %v547 = vmul.f32 %v530, %v545
    %549 = vrot.lane.b32.xlu0 %v547, 32
    %v550 = vpop.permute.xlu0 %549
    %v551 = vsel %vm441, %v550, 0
    %553 = vmatprep.subr.mxu0 0.0
    %554 = vmatpush1.msra.mxu0 0.0
    %555 = vmatprep.subr.mxu0 0.0
    %556 = vmatpush1.msra.mxu0 0.0
    %557 = vmatprep.subr.mxu0 0.0
    %558 = vmatpush1.msra.mxu0 0.0
    %559 = vmatprep.subr.mxu0 0.0
    %560 = vmatpush1.msra.mxu0 0.0
    %561 = vmatprep.subr.mxu0 0.0
    %562 = vmatpush1.msra.mxu0 0.0
    %563 = vmatprep.subr.mxu0 0.0
    %564 = vmatpush1.msra.mxu0 0.0
    %565 = vmatprep.subr.mxu0 0.0
    %566 = vmatpush1.msra.mxu0 0.0
    %567 = vmatprep.subr.mxu0 0.0
    %568 = vmatpush1.msra.mxu0 0.0
    %569 = vmatprep.subr.mxu0 0.0
    %570 = vmatpush1.msra.mxu0 0.0
    %571 = vmatprep.subr.mxu0 0.0
    %572 = vmatpush1.msra.mxu0 0.0
    %573 = vmatprep.subr.mxu0 0.0
    %574 = vmatpush1.msra.mxu0 0.0
    %575 = vmatprep.subr.mxu0 0.0
    %576 = vmatpush1.msra.mxu0 0.0
    %577 = vmatprep.subr.mxu0 0.0
    %578 = vmatpush1.msra.mxu0 %v440
    %579 = vmatprep.subr.mxu0 0.0
    %580 = vmatpush1.msra.mxu0 %v439
    %581 = vmatprep.subr.mxu0 0.0
    %582 = vmatpush1.msra.mxu0 %v438
    %583 = vmatprep.subr.mxu0 0.0
    %584 = vmatpush1.msra.mxu0 %v437
    %585 = vmatprep.subr.mxu0 0.0
    %586 = vmatpush2.msra.mxu0 0.0
    %587 = vmatprep.subr.mxu0 0.0
    %588 = vmatpush2.msra.mxu0 0.0
    %589 = vmatprep.subr.mxu0 0.0
    %590 = vmatpush2.msra.mxu0 0.0
    %591 = vmatprep.subr.mxu0 0.0
    %592 = vmatpush2.msra.mxu0 0.0
    %593 = vmatprep.subr.mxu0 0.0
    %594 = vmatpush2.msra.mxu0 0.0
    %595 = vmatprep.subr.mxu0 0.0
    %596 = vmatpush2.msra.mxu0 0.0
    %597 = vmatprep.subr.mxu0 0.0
    %598 = vmatpush2.msra.mxu0 0.0
    %599 = vmatprep.subr.mxu0 0.0
    %600 = vmatpush2.msra.mxu0 0.0
    %601 = vmatprep.subr.mxu0 0.0
    %602 = vmatpush2.msra.mxu0 0.0
    %603 = vmatprep.subr.mxu0 0.0
    %604 = vmatpush2.msra.mxu0 0.0
    %605 = vmatprep.subr.mxu0 0.0
    %606 = vmatpush2.msra.mxu0 0.0
    %607 = vmatprep.subr.mxu0 0.0
    %608 = vmatpush2.msra.mxu0 0.0
    %609 = vmatprep.subr.mxu0 0.0
    %610 = vmatpush2.msra.mxu0 0.0
    %611 = vmatprep.subr.mxu0 0.0
    %612 = vmatpush2.msra.mxu0 0.0
    %613 = vmatprep.subr.mxu0 0.0
    %614 = vmatpush2.msra.mxu0 0.0
    %615 = vmatprep.subr.mxu0 0.0
    %616 = vmatpush2.msra.mxu0 0.0
    %617 = vmatprep.mubr.f32.mxu0 0.0
    %618 = vmatmul.mubr.f32.gmra.mxu0 %v551
    %v619 = vpop.f32.mrf.mxu0
    %v620 = vadd.f32 0.0, %v619
    %v621 = vpop.f32.mrf.mxu0
    %622 = vdwg.mxu0
    %v623 = vadd.f32 %v428, %v620
    %v624 = vtanh.pop %v623
    %v625 = vmul.f32 %v624, %v521
    %v626 = vadd.f32 %v625, %v528
    %v627 = vmul.f32 %v626, %v541
    %629 = vrot.lane.b32.xlu0 %v626, 64
    %v630 = vpop.permute.xlu0 %629
    %v632 = vmul.f32 %v626, %v630
    %634 = vrot.lane.b32.xlu0 %v632, 32
    %v635 = vpop.permute.xlu0 %634
    %v637 = vadd.f32 %v627, %v635
    %v638 = vtanh.pop %v637
    %640 = vrot.lane.b32.xlu0 %v638, 64
    %v641 = vpop.permute.xlu0 %640
    %v643 = vmul.f32 %v626, %v641
    %645 = vrot.lane.b32.xlu0 %v643, 32
    %v646 = vpop.permute.xlu0 %645
    %v647 = vsel %vm441, %v646, 0
    %649 = vmatprep.subr.mxu0 0.0
    %650 = vmatpush1.msra.mxu0 0.0
    %651 = vmatprep.subr.mxu0 0.0
    %652 = vmatpush1.msra.mxu0 0.0
    %653 = vmatprep.subr.mxu0 0.0
    %654 = vmatpush1.msra.mxu0 0.0
    %655 = vmatprep.subr.mxu0 0.0
    %656 = vmatpush1.msra.mxu0 0.0
    %657 = vmatprep.subr.mxu0 0.0
    %658 = vmatpush1.msra.mxu0 0.0
    %659 = vmatprep.subr.mxu0 0.0
    %660 = vmatpush1.msra.mxu0 0.0
    %661 = vmatprep.subr.mxu0 0.0
    %662 = vmatpush1.msra.mxu0 0.0
    %663 = vmatprep.subr.mxu0 0.0
    %664 = vmatpush1.msra.mxu0 0.0
    %665 = vmatprep.subr.mxu0 0.0
    %666 = vmatpush1.msra.mxu0 0.0
    %667 = vmatprep.subr.mxu0 0.0
    %668 = vmatpush1.msra.mxu0 0.0
    %669 = vmatprep.subr.mxu0 0.0
    %670 = vmatpush1.msra.mxu0 0.0
    %671 = vmatprep.subr.mxu0 0.0
    %672 = vmatpush1.msra.mxu0 0.0
    %673 = vmatprep.subr.mxu0 0.0
    %674 = vmatpush1.msra.mxu0 %v440
    %675 = vmatprep.subr.mxu0 0.0
    %676 = vmatpush1.msra.mxu0 %v439
    %677 = vmatprep.subr.mxu0 0.0
    %678 = vmatpush1.msra.mxu0 %v438
    %679 = vmatprep.subr.mxu0 0.0
    %680 = vmatpush1.msra.mxu0 %v437
    %681 = vmatprep.subr.mxu0 0.0
    %682 = vmatpush2.msra.mxu0 0.0
    %683 = vmatprep.subr.mxu0 0.0
    %684 = vmatpush2.msra.mxu0 0.0
    %685 = vmatprep.subr.mxu0 0.0
    %686 = vmatpush2.msra.mxu0 0.0
    %687 = vmatprep.subr.mxu0 0.0
    %688 = vmatpush2.msra.mxu0 0.0
    %689 = vmatprep.subr.mxu0 0.0
    %690 = vmatpush2.msra.mxu0 0.0
    %691 = vmatprep.subr.mxu0 0.0
    %692 = vmatpush2.msra.mxu0 0.0
    %693 = vmatprep.subr.mxu0 0.0
    %694 = vmatpush2.msra.mxu0 0.0
    %695 = vmatprep.subr.mxu0 0.0
    %696 = vmatpush2.msra.mxu0 0.0
    %697 = vmatprep.subr.mxu0 0.0
    %698 = vmatpush2.msra.mxu0 0.0
    %699 = vmatprep.subr.mxu0 0.0
    %700 = vmatpush2.msra.mxu0 0.0
    %701 = vmatprep.subr.mxu0 0.0
    %702 = vmatpush2.msra.mxu0 0.0
    %703 = vmatprep.subr.mxu0 0.0
    %704 = vmatpush2.msra.mxu0 0.0
    %705 = vmatprep.subr.mxu0 0.0
    %706 = vmatpush2.msra.mxu0 0.0
    %707 = vmatprep.subr.mxu0 0.0
    %708 = vmatpush2.msra.mxu0 0.0
    %709 = vmatprep.subr.mxu0 0.0
    %710 = vmatpush2.msra.mxu0 0.0
    %711 = vmatprep.subr.mxu0 0.0
    %712 = vmatpush2.msra.mxu0 0.0
    %713 = vmatprep.mubr.f32.mxu0 0.0
    %714 = vmatmul.mubr.f32.gmra.mxu0 %v647
    %v715 = vpop.f32.mrf.mxu0
    %v716 = vadd.f32 0.0, %v715
    %v717 = vpop.f32.mrf.mxu0
    %718 = vdwg.mxu0
    %v719 = vadd.f32 %v429, %v716
    %v720 = vtanh.pop %v719
    %v721 = vmul.f32 %v720, %v521
    %v722 = vadd.f32 %v721, %v528
    %v723 = vmul.f32 %v722, %v637
    %725 = vrot.lane.b32.xlu0 %v722, 64
    %v726 = vpop.permute.xlu0 %725
    %v728 = vmul.f32 %v722, %v726
    %730 = vrot.lane.b32.xlu0 %v728, 32
    %v731 = vpop.permute.xlu0 %730
    %v733 = vadd.f32 %v723, %v731
    %v734 = vtanh.pop %v733
    %736 = vrot.lane.b32.xlu0 %v734, 64
    %v737 = vpop.permute.xlu0 %736
    %v739 = vmul.f32 %v722, %v737
    %741 = vrot.lane.b32.xlu0 %v739, 32
    %v742 = vpop.permute.xlu0 %741
    %v743 = vsel %vm441, %v742, 0
    %745 = vmatprep.subr.mxu0 0.0
    %746 = vmatpush1.msra.mxu0 0.0
    %747 = vmatprep.subr.mxu0 0.0
    %748 = vmatpush1.msra.mxu0 0.0
    %749 = vmatprep.subr.mxu0 0.0
    %750 = vmatpush1.msra.mxu0 0.0
    %751 = vmatprep.subr.mxu0 0.0
    %752 = vmatpush1.msra.mxu0 0.0
    %753 = vmatprep.subr.mxu0 0.0
    %754 = vmatpush1.msra.mxu0 0.0
    %755 = vmatprep.subr.mxu0 0.0
    %756 = vmatpush1.msra.mxu0 0.0
    %757 = vmatprep.subr.mxu0 0.0
    %758 = vmatpush1.msra.mxu0 0.0
    %759 = vmatprep.subr.mxu0 0.0
    %760 = vmatpush1.msra.mxu0 0.0
    %761 = vmatprep.subr.mxu0 0.0
    %762 = vmatpush1.msra.mxu0 0.0
    %763 = vmatprep.subr.mxu0 0.0
    %764 = vmatpush1.msra.mxu0 0.0
    %765 = vmatprep.subr.mxu0 0.0
    %766 = vmatpush1.msra.mxu0 0.0
    %767 = vmatprep.subr.mxu0 0.0
    %768 = vmatpush1.msra.mxu0 0.0
    %769 = vmatprep.subr.mxu0 0.0
    %770 = vmatpush1.msra.mxu0 %v440
    %771 = vmatprep.subr.mxu0 0.0
    %772 = vmatpush1.msra.mxu0 %v439
    %773 = vmatprep.subr.mxu0 0.0
    %774 = vmatpush1.msra.mxu0 %v438
    %775 = vmatprep.subr.mxu0 0.0
    %776 = vmatpush1.msra.mxu0 %v437
    %777 = vmatprep.subr.mxu0 0.0
    %778 = vmatpush2.msra.mxu0 0.0
    %779 = vmatprep.subr.mxu0 0.0
    %780 = vmatpush2.msra.mxu0 0.0
    %781 = vmatprep.subr.mxu0 0.0
    %782 = vmatpush2.msra.mxu0 0.0
    %783 = vmatprep.subr.mxu0 0.0
    %784 = vmatpush2.msra.mxu0 0.0
    %785 = vmatprep.subr.mxu0 0.0
    %786 = vmatpush2.msra.mxu0 0.0
    %787 = vmatprep.subr.mxu0 0.0
    %788 = vmatpush2.msra.mxu0 0.0
    %789 = vmatprep.subr.mxu0 0.0
    %790 = vmatpush2.msra.mxu0 0.0
    %791 = vmatprep.subr.mxu0 0.0
    %792 = vmatpush2.msra.mxu0 0.0
    %793 = vmatprep.subr.mxu0 0.0
    %794 = vmatpush2.msra.mxu0 0.0
    %795 = vmatprep.subr.mxu0 0.0
    %796 = vmatpush2.msra.mxu0 0.0
    %797 = vmatprep.subr.mxu0 0.0
    %798 = vmatpush2.msra.mxu0 0.0
    %799 = vmatprep.subr.mxu0 0.0
    %800 = vmatpush2.msra.mxu0 0.0
    %801 = vmatprep.subr.mxu0 0.0
    %802 = vmatpush2.msra.mxu0 0.0
    %803 = vmatprep.subr.mxu0 0.0
    %804 = vmatpush2.msra.mxu0 0.0
    %805 = vmatprep.subr.mxu0 0.0
    %806 = vmatpush2.msra.mxu0 0.0
    %807 = vmatprep.subr.mxu0 0.0
    %808 = vmatpush2.msra.mxu0 0.0
    %809 = vmatprep.mubr.f32.mxu0 0.0
    %810 = vmatmul.mubr.f32.gmra.mxu0 %v743
    %v811 = vpop.f32.mrf.mxu0
    %v812 = vadd.f32 0.0, %v811
    %v813 = vpop.f32.mrf.mxu0
    %814 = vdwg.mxu0
    %v815 = vadd.f32 %v430, %v812
    %v816 = vtanh.pop %v815
    %v817 = vmul.f32 %v816, %v521
    %v818 = vadd.f32 %v817, %v528
    %v819 = vmul.f32 %v818, %v733
    %821 = vrot.lane.b32.xlu0 %v818, 64
    %v822 = vpop.permute.xlu0 %821
    %v824 = vmul.f32 %v818, %v822
    %826 = vrot.lane.b32.xlu0 %v824, 32
    %v827 = vpop.permute.xlu0 %826
    %v829 = vadd.f32 %v819, %v827
    %v830 = vtanh.pop %v829
    %832 = vrot.lane.b32.xlu0 %v830, 64
    %v833 = vpop.permute.xlu0 %832
    %v835 = vmul.f32 %v818, %v833
    %837 = vrot.lane.b32.xlu0 %v835, 32
    %v838 = vpop.permute.xlu0 %837
    %v839 = vsel %vm441, %v838, 0
    %841 = vmatprep.subr.mxu0 0.0
    %842 = vmatpush1.msra.mxu0 0.0
    %843 = vmatprep.subr.mxu0 0.0
    %844 = vmatpush1.msra.mxu0 0.0
    %845 = vmatprep.subr.mxu0 0.0
    %846 = vmatpush1.msra.mxu0 0.0
    %847 = vmatprep.subr.mxu0 0.0
    %848 = vmatpush1.msra.mxu0 0.0
    %849 = vmatprep.subr.mxu0 0.0
    %850 = vmatpush1.msra.mxu0 0.0
    %851 = vmatprep.subr.mxu0 0.0
    %852 = vmatpush1.msra.mxu0 0.0
    %853 = vmatprep.subr.mxu0 0.0
    %854 = vmatpush1.msra.mxu0 0.0
    %855 = vmatprep.subr.mxu0 0.0
    %856 = vmatpush1.msra.mxu0 0.0
    %857 = vmatprep.subr.mxu0 0.0
    %858 = vmatpush1.msra.mxu0 0.0
    %859 = vmatprep.subr.mxu0 0.0
    %860 = vmatpush1.msra.mxu0 0.0
    %861 = vmatprep.subr.mxu0 0.0
    %862 = vmatpush1.msra.mxu0 0.0
    %863 = vmatprep.subr.mxu0 0.0
    %864 = vmatpush1.msra.mxu0 0.0
    %865 = vmatprep.subr.mxu0 0.0
    %866 = vmatpush1.msra.mxu0 %v440
    %867 = vmatprep.subr.mxu0 0.0
    %868 = vmatpush1.msra.mxu0 %v439
    %869 = vmatprep.subr.mxu0 0.0
    %870 = vmatpush1.msra.mxu0 %v438
    %871 = vmatprep.subr.mxu0 0.0
    %872 = vmatpush1.msra.mxu0 %v437
    %873 = vmatprep.subr.mxu0 0.0
    %874 = vmatpush2.msra.mxu0 0.0
    %875 = vmatprep.subr.mxu0 0.0
    %876 = vmatpush2.msra.mxu0 0.0
    %877 = vmatprep.subr.mxu0 0.0
    %878 = vmatpush2.msra.mxu0 0.0
    %879 = vmatprep.subr.mxu0 0.0
    %880 = vmatpush2.msra.mxu0 0.0
    %881 = vmatprep.subr.mxu0 0.0
    %882 = vmatpush2.msra.mxu0 0.0
    %883 = vmatprep.subr.mxu0 0.0
    %884 = vmatpush2.msra.mxu0 0.0
    %885 = vmatprep.subr.mxu0 0.0
    %886 = vmatpush2.msra.mxu0 0.0
    %887 = vmatprep.subr.mxu0 0.0
    %888 = vmatpush2.msra.mxu0 0.0
    %889 = vmatprep.subr.mxu0 0.0
    %890 = vmatpush2.msra.mxu0 0.0
    %891 = vmatprep.subr.mxu0 0.0
    %892 = vmatpush2.msra.mxu0 0.0
    %893 = vmatprep.subr.mxu0 0.0
    %894 = vmatpush2.msra.mxu0 0.0
    %895 = vmatprep.subr.mxu0 0.0
    %896 = vmatpush2.msra.mxu0 0.0
    %897 = vmatprep.subr.mxu0 0.0
    %898 = vmatpush2.msra.mxu0 0.0
    %899 = vmatprep.subr.mxu0 0.0
    %900 = vmatpush2.msra.mxu0 0.0
    %901 = vmatprep.subr.mxu0 0.0
    %902 = vmatpush2.msra.mxu0 0.0
    %903 = vmatprep.subr.mxu0 0.0
    %904 = vmatpush2.msra.mxu0 0.0
    %905 = vmatprep.mubr.f32.mxu0 0.0
    %906 = vmatmul.mubr.f32.gmra.mxu0 %v839
    %v907 = vpop.f32.mrf.mxu0
    %v908 = vadd.f32 0.0, %v907
    %v909 = vpop.f32.mrf.mxu0
    %910 = vdwg.mxu0
    %v911 = vadd.f32 %v431, %v908
    %v912 = vtanh.pop %v911
    %v913 = vmul.f32 %v912, %v521
    %v914 = vadd.f32 %v913, %v528
    %v915 = vmul.f32 %v914, %v829
    %917 = vrot.lane.b32.xlu0 %v914, 64
    %v918 = vpop.permute.xlu0 %917
    %v920 = vmul.f32 %v914, %v918
    %922 = vrot.lane.b32.xlu0 %v920, 32
    %v923 = vpop.permute.xlu0 %922
    %v925 = vadd.f32 %v915, %v923
    %v926 = vtanh.pop %v925
    %928 = vrot.lane.b32.xlu0 %v926, 64
    %v929 = vpop.permute.xlu0 %928
    %v931 = vmul.f32 %v914, %v929
    %933 = vrot.lane.b32.xlu0 %v931, 32
    %v934 = vpop.permute.xlu0 %933
    %v935 = vsel %vm441, %v934, 0
    %937 = vmatprep.subr.mxu0 0.0
    %938 = vmatpush1.msra.mxu0 0.0
    %939 = vmatprep.subr.mxu0 0.0
    %940 = vmatpush1.msra.mxu0 0.0
    %941 = vmatprep.subr.mxu0 0.0
    %942 = vmatpush1.msra.mxu0 0.0
    %943 = vmatprep.subr.mxu0 0.0
    %944 = vmatpush1.msra.mxu0 0.0
    %945 = vmatprep.subr.mxu0 0.0
    %946 = vmatpush1.msra.mxu0 0.0
    %947 = vmatprep.subr.mxu0 0.0
    %948 = vmatpush1.msra.mxu0 0.0
    %949 = vmatprep.subr.mxu0 0.0
    %950 = vmatpush1.msra.mxu0 0.0
    %951 = vmatprep.subr.mxu0 0.0
    %952 = vmatpush1.msra.mxu0 0.0
    %953 = vmatprep.subr.mxu0 0.0
    %954 = vmatpush1.msra.mxu0 0.0
    %955 = vmatprep.subr.mxu0 0.0
    %956 = vmatpush1.msra.mxu0 0.0
    %957 = vmatprep.subr.mxu0 0.0
    %958 = vmatpush1.msra.mxu0 0.0
    %959 = vmatprep.subr.mxu0 0.0
    %960 = vmatpush1.msra.mxu0 0.0
    %961 = vmatprep.subr.mxu0 0.0
    %962 = vmatpush1.msra.mxu0 %v440
    %963 = vmatprep.subr.mxu0 0.0
    %964 = vmatpush1.msra.mxu0 %v439
    %965 = vmatprep.subr.mxu0 0.0
    %966 = vmatpush1.msra.mxu0 %v438
    %967 = vmatprep.subr.mxu0 0.0
    %968 = vmatpush1.msra.mxu0 %v437
    %969 = vmatprep.subr.mxu0 0.0
    %970 = vmatpush2.msra.mxu0 0.0
    %971 = vmatprep.subr.mxu0 0.0
    %972 = vmatpush2.msra.mxu0 0.0
    %973 = vmatprep.subr.mxu0 0.0
    %974 = vmatpush2.msra.mxu0 0.0
    %975 = vmatprep.subr.mxu0 0.0
    %976 = vmatpush2.msra.mxu0 0.0
    %977 = vmatprep.subr.mxu0 0.0
    %978 = vmatpush2.msra.mxu0 0.0
    %979 = vmatprep.subr.mxu0 0.0
    %980 = vmatpush2.msra.mxu0 0.0
    %981 = vmatprep.subr.mxu0 0.0
    %982 = vmatpush2.msra.mxu0 0.0
    %983 = vmatprep.subr.mxu0 0.0
    %984 = vmatpush2.msra.mxu0 0.0
    %985 = vmatprep.subr.mxu0 0.0
    %986 = vmatpush2.msra.mxu0 0.0
    %987 = vmatprep.subr.mxu0 0.0
    %988 = vmatpush2.msra.mxu0 0.0
    %989 = vmatprep.subr.mxu0 0.0
    %990 = vmatpush2.msra.mxu0 0.0
    %991 = vmatprep.subr.mxu0 0.0
    %992 = vmatpush2.msra.mxu0 0.0
    %993 = vmatprep.subr.mxu0 0.0
    %994 = vmatpush2.msra.mxu0 0.0
    %995 = vmatprep.subr.mxu0 0.0
    %996 = vmatpush2.msra.mxu0 0.0
    %997 = vmatprep.subr.mxu0 0.0
    %998 = vmatpush2.msra.mxu0 0.0
    %999 = vmatprep.subr.mxu0 0.0
    %1000 = vmatpush2.msra.mxu0 0.0
    %1001 = vmatprep.mubr.f32.mxu0 0.0
    %1002 = vmatmul.mubr.f32.gmra.mxu0 %v935
    %v1003 = vpop.f32.mrf.mxu0
    %v1004 = vadd.f32 0.0, %v1003
    %v1005 = vpop.f32.mrf.mxu0
    %1006 = vdwg.mxu0
    %v1007 = vadd.f32 %v432, %v1004
    %v1008 = vtanh.pop %v1007
    %v1009 = vmul.f32 %v1008, %v521
    %v1010 = vadd.f32 %v1009, %v528
    %v1011 = vmul.f32 %v1010, %v925
    %1013 = vrot.lane.b32.xlu0 %v1010, 64
    %v1014 = vpop.permute.xlu0 %1013
    %v1016 = vmul.f32 %v1010, %v1014
    %1018 = vrot.lane.b32.xlu0 %v1016, 32
    %v1019 = vpop.permute.xlu0 %1018
    %v1021 = vadd.f32 %v1011, %v1019
    %v1022 = vtanh.pop %v1021
    %1024 = vrot.lane.b32.xlu0 %v1022, 64
    %v1025 = vpop.permute.xlu0 %1024
    %v1027 = vmul.f32 %v1010, %v1025
    %1029 = vrot.lane.b32.xlu0 %v1027, 32
    %v1030 = vpop.permute.xlu0 %1029
    %v1031 = vsel %vm441, %v1030, 0
    %1033 = vmatprep.subr.mxu0 0.0
    %1034 = vmatpush1.msra.mxu0 0.0
    %1035 = vmatprep.subr.mxu0 0.0
    %1036 = vmatpush1.msra.mxu0 0.0
    %1037 = vmatprep.subr.mxu0 0.0
    %1038 = vmatpush1.msra.mxu0 0.0
    %1039 = vmatprep.subr.mxu0 0.0
    %1040 = vmatpush1.msra.mxu0 0.0
    %1041 = vmatprep.subr.mxu0 0.0
    %1042 = vmatpush1.msra.mxu0 0.0
    %1043 = vmatprep.subr.mxu0 0.0
    %1044 = vmatpush1.msra.mxu0 0.0
    %1045 = vmatprep.subr.mxu0 0.0
    %1046 = vmatpush1.msra.mxu0 0.0
    %1047 = vmatprep.subr.mxu0 0.0
    %1048 = vmatpush1.msra.mxu0 0.0
    %1049 = vmatprep.subr.mxu0 0.0
    %1050 = vmatpush1.msra.mxu0 0.0
    %1051 = vmatprep.subr.mxu0 0.0
    %1052 = vmatpush1.msra.mxu0 0.0
    %1053 = vmatprep.subr.mxu0 0.0
    %1054 = vmatpush1.msra.mxu0 0.0
    %1055 = vmatprep.subr.mxu0 0.0
    %1056 = vmatpush1.msra.mxu0 0.0
    %1057 = vmatprep.subr.mxu0 0.0
    %1058 = vmatpush1.msra.mxu0 %v440
    %1059 = vmatprep.subr.mxu0 0.0
    %1060 = vmatpush1.msra.mxu0 %v439
    %1061 = vmatprep.subr.mxu0 0.0
    %1062 = vmatpush1.msra.mxu0 %v438
    %1063 = vmatprep.subr.mxu0 0.0
    %1064 = vmatpush1.msra.mxu0 %v437
    %1065 = vmatprep.subr.mxu0 0.0
    %1066 = vmatpush2.msra.mxu0 0.0
    %1067 = vmatprep.subr.mxu0 0.0
    %1068 = vmatpush2.msra.mxu0 0.0
    %1069 = vmatprep.subr.mxu0 0.0
    %1070 = vmatpush2.msra.mxu0 0.0
    %1071 = vmatprep.subr.mxu0 0.0
    %1072 = vmatpush2.msra.mxu0 0.0
    %1073 = vmatprep.subr.mxu0 0.0
    %1074 = vmatpush2.msra.mxu0 0.0
    %1075 = vmatprep.subr.mxu0 0.0
    %1076 = vmatpush2.msra.mxu0 0.0
    %1077 = vmatprep.subr.mxu0 0.0
    %1078 = vmatpush2.msra.mxu0 0.0
    %1079 = vmatprep.subr.mxu0 0.0
    %1080 = vmatpush2.msra.mxu0 0.0
    %1081 = vmatprep.subr.mxu0 0.0
    %1082 = vmatpush2.msra.mxu0 0.0
    %1083 = vmatprep.subr.mxu0 0.0
    %1084 = vmatpush2.msra.mxu0 0.0
    %1085 = vmatprep.subr.mxu0 0.0
    %1086 = vmatpush2.msra.mxu0 0.0
    %1087 = vmatprep.subr.mxu0 0.0
    %1088 = vmatpush2.msra.mxu0 0.0
    %1089 = vmatprep.subr.mxu0 0.0
    %1090 = vmatpush2.msra.mxu0 0.0
    %1091 = vmatprep.subr.mxu0 0.0
    %1092 = vmatpush2.msra.mxu0 0.0
    %1093 = vmatprep.subr.mxu0 0.0
    %1094 = vmatpush2.msra.mxu0 0.0
    %1095 = vmatprep.subr.mxu0 0.0
    %1096 = vmatpush2.msra.mxu0 0.0
    %1097 = vmatprep.mubr.f32.mxu0 0.0
    %1098 = vmatmul.mubr.f32.gmra.mxu0 %v1031
    %v1099 = vpop.f32.mrf.mxu0
    %v1100 = vadd.f32 0.0, %v1099
    %v1101 = vpop.f32.mrf.mxu0
    %1102 = vdwg.mxu0
    %v1103 = vadd.f32 %v433, %v1100
    %v1104 = vtanh.pop %v1103
    %v1105 = vmul.f32 %v1104, %v521
    %v1106 = vadd.f32 %v1105, %v528
    %v1107 = vmul.f32 %v1106, %v1021
    %1109 = vrot.lane.b32.xlu0 %v1106, 64
    %v1110 = vpop.permute.xlu0 %1109
    %v1112 = vmul.f32 %v1106, %v1110
    %1114 = vrot.lane.b32.xlu0 %v1112, 32
    %v1115 = vpop.permute.xlu0 %1114
    %v1117 = vadd.f32 %v1107, %v1115
    %v1118 = vtanh.pop %v1117
    %1120 = vrot.lane.b32.xlu0 %v1118, 64
    %v1121 = vpop.permute.xlu0 %1120
    %v1123 = vmul.f32 %v1106, %v1121
    %1125 = vrot.lane.b32.xlu0 %v1123, 32
    %v1126 = vpop.permute.xlu0 %1125
    %v1127 = vsel %vm441, %v1126, 0
    %1129 = vmatprep.subr.mxu0 0.0
    %1130 = vmatpush1.msra.mxu0 0.0
    %1131 = vmatprep.subr.mxu0 0.0
    %1132 = vmatpush1.msra.mxu0 0.0
    %1133 = vmatprep.subr.mxu0 0.0
    %1134 = vmatpush1.msra.mxu0 0.0
    %1135 = vmatprep.subr.mxu0 0.0
    %1136 = vmatpush1.msra.mxu0 0.0
    %1137 = vmatprep.subr.mxu0 0.0
    %1138 = vmatpush1.msra.mxu0 0.0
    %1139 = vmatprep.subr.mxu0 0.0
    %1140 = vmatpush1.msra.mxu0 0.0
    %1141 = vmatprep.subr.mxu0 0.0
    %1142 = vmatpush1.msra.mxu0 0.0
    %1143 = vmatprep.subr.mxu0 0.0
    %1144 = vmatpush1.msra.mxu0 0.0
    %1145 = vmatprep.subr.mxu0 0.0
    %1146 = vmatpush1.msra.mxu0 0.0
    %1147 = vmatprep.subr.mxu0 0.0
    %1148 = vmatpush1.msra.mxu0 0.0
    %1149 = vmatprep.subr.mxu0 0.0
    %1150 = vmatpush1.msra.mxu0 0.0
    %1151 = vmatprep.subr.mxu0 0.0
    %1152 = vmatpush1.msra.mxu0 0.0
    %1153 = vmatprep.subr.mxu0 0.0
    %1154 = vmatpush1.msra.mxu0 %v440
    %1155 = vmatprep.subr.mxu0 0.0
    %1156 = vmatpush1.msra.mxu0 %v439
    %1157 = vmatprep.subr.mxu0 0.0
    %1158 = vmatpush1.msra.mxu0 %v438
    %1159 = vmatprep.subr.mxu0 0.0
    %1160 = vmatpush1.msra.mxu0 %v437
    %1161 = vmatprep.subr.mxu0 0.0
    %1162 = vmatpush2.msra.mxu0 0.0
    %1163 = vmatprep.subr.mxu0 0.0
    %1164 = vmatpush2.msra.mxu0 0.0
    %1165 = vmatprep.subr.mxu0 0.0
    %1166 = vmatpush2.msra.mxu0 0.0
    %1167 = vmatprep.subr.mxu0 0.0
    %1168 = vmatpush2.msra.mxu0 0.0
    %1169 = vmatprep.subr.mxu0 0.0
    %1170 = vmatpush2.msra.mxu0 0.0
    %1171 = vmatprep.subr.mxu0 0.0
    %1172 = vmatpush2.msra.mxu0 0.0
    %1173 = vmatprep.subr.mxu0 0.0
    %1174 = vmatpush2.msra.mxu0 0.0
    %1175 = vmatprep.subr.mxu0 0.0
    %1176 = vmatpush2.msra.mxu0 0.0
    %1177 = vmatprep.subr.mxu0 0.0
    %1178 = vmatpush2.msra.mxu0 0.0
    %1179 = vmatprep.subr.mxu0 0.0
    %1180 = vmatpush2.msra.mxu0 0.0
    %1181 = vmatprep.subr.mxu0 0.0
    %1182 = vmatpush2.msra.mxu0 0.0
    %1183 = vmatprep.subr.mxu0 0.0
    %1184 = vmatpush2.msra.mxu0 0.0
    %1185 = vmatprep.subr.mxu0 0.0
    %1186 = vmatpush2.msra.mxu0 0.0
    %1187 = vmatprep.subr.mxu0 0.0
    %1188 = vmatpush2.msra.mxu0 0.0
    %1189 = vmatprep.subr.mxu0 0.0
    %1190 = vmatpush2.msra.mxu0 0.0
    %1191 = vmatprep.subr.mxu0 0.0
    %1192 = vmatpush2.msra.mxu0 0.0
    %1193 = vmatprep.mubr.f32.mxu0 0.0
    %1194 = vmatmul.mubr.f32.gmra.mxu0 %v1127
    %v1195 = vpop.f32.mrf.mxu0
    %v1196 = vadd.f32 0.0, %v1195
    %v1197 = vpop.f32.mrf.mxu0
    %1198 = vdwg.mxu0
    %v1199 = vadd.f32 %v434, %v1196
    %v1200 = vtanh.pop %v1199
    %v1201 = vmul.f32 %v1200, %v521
    %v1202 = vadd.f32 %v1201, %v528
    %v1203 = vmul.f32 %v1202, %v1117
    %1205 = vrot.lane.b32.xlu0 %v1202, 64
    %v1206 = vpop.permute.xlu0 %1205
    %v1208 = vmul.f32 %v1202, %v1206
    %1210 = vrot.lane.b32.xlu0 %v1208, 32
    %v1211 = vpop.permute.xlu0 %1210
    %v1213 = vadd.f32 %v1203, %v1211
    %v1214 = vtanh.pop %v1213
    %1216 = vrot.lane.b32.xlu0 %v1214, 64
    %v1217 = vpop.permute.xlu0 %1216
    %v1219 = vmul.f32 %v1202, %v1217
    %v1220 = vld [vmem:[%s1] sm:$0xff]
    %v1221 = vld [vmem:[#allocation10] sm:$0x1]
    %1223 = vset.pattern.permute.xlu0 0
    %1224 = vperm.xlu0 %1223, %v1220
    %v1225 = vpop.permute.xlu0 %1224
    %v1227 = vlaneseq
    %v1228 = vshrl.u32 %v1227, 7
    %v1229 = vsub.s32 0, %v1228
    %v1230 = vrot.slane %v1221, %v1229
    %v1231 = vmul.f32 %v1225, %v1230
    %v1232 = vld [vmem:[#allocation12] sm:$0x1]
    %v1234 = vlaneseq
    %v1235 = vshrl.u32 %v1234, 7
    %v1236 = vsub.s32 0, %v1235
    %v1237 = vrot.slane %v1232, %v1236
    %v1239 = vadd.f32 %v1231, %v1237
    %v1240 = vld [vmem:[#allocation10 + $0x1] sm:$0x1]
    %1241 = vset.pattern.permute.xlu0 1
    %1242 = vperm.xlu0 %1241, %v1220
    %v1243 = vpop.permute.xlu0 %1242
    %v1245 = vlaneseq
    %v1246 = vshrl.u32 %v1245, 7
    %v1247 = vsub.s32 0, %v1246
    %v1248 = vrot.slane %v1240, %v1247
    %v1249 = vmul.f32 %v1243, %v1248
    %v1250 = vadd.f32 %v1239, %v1249
    %v1251 = vld [vmem:[#allocation10 + $0x2] sm:$0x1]
    %1252 = vset.pattern.permute.xlu0 2
    %1253 = vperm.xlu0 %1252, %v1220
    %v1254 = vpop.permute.xlu0 %1253
    %v1256 = vlaneseq
    %v1257 = vshrl.u32 %v1256, 7
    %v1258 = vsub.s32 0, %v1257
    %v1259 = vrot.slane %v1251, %v1258
    %v1260 = vmul.f32 %v1254, %v1259
    %v1261 = vadd.f32 %v1250, %v1260
    %v1262 = vld [vmem:[#allocation9] sm:$0xff]
    %v1263 = vld [vmem:[#allocation9 + $0x8] sm:$0xff]
    %v1264 = vld [vmem:[#allocation9 + $0x10] sm:$0xff]
    %v1265 = vld [vmem:[#allocation9 + $0x18] sm:$0xff]
    %1267 = vrot.lane.b32.xlu0 %v1219, 32
    %v1268 = vpop.permute.xlu0 %1267
    %v1269 = vsel %vm441, %v1268, 0
    %1271 = vmatprep.subr.mxu0 0.0
    %1272 = vmatpush1.msra.mxu0 0.0
    %1273 = vmatprep.subr.mxu0 0.0
    %1274 = vmatpush1.msra.mxu0 0.0
    %1275 = vmatprep.subr.mxu0 0.0
    %1276 = vmatpush1.msra.mxu0 0.0
    %1277 = vmatprep.subr.mxu0 0.0
    %1278 = vmatpush1.msra.mxu0 0.0
    %1279 = vmatprep.subr.mxu0 0.0
    %1280 = vmatpush1.msra.mxu0 0.0
    %1281 = vmatprep.subr.mxu0 0.0
    %1282 = vmatpush1.msra.mxu0 0.0
    %1283 = vmatprep.subr.mxu0 0.0
    %1284 = vmatpush1.msra.mxu0 0.0
    %1285 = vmatprep.subr.mxu0 0.0
    %1286 = vmatpush1.msra.mxu0 0.0
    %1287 = vmatprep.subr.mxu0 0.0
    %1288 = vmatpush1.msra.mxu0 0.0
    %1289 = vmatprep.subr.mxu0 0.0
    %1290 = vmatpush1.msra.mxu0 0.0
    %1291 = vmatprep.subr.mxu0 0.0
    %1292 = vmatpush1.msra.mxu0 0.0
    %1293 = vmatprep.subr.mxu0 0.0
    %1294 = vmatpush1.msra.mxu0 0.0
    %1295 = vmatprep.subr.mxu0 0.0
    %1296 = vmatpush1.msra.mxu0 %v1265
    %1297 = vmatprep.subr.mxu0 0.0
    %1298 = vmatpush1.msra.mxu0 %v1264
    %1299 = vmatprep.subr.mxu0 0.0
    %1300 = vmatpush1.msra.mxu0 %v1263
    %1301 = vmatprep.subr.mxu0 0.0
    %1302 = vmatpush1.msra.mxu0 %v1262
    %1303 = vmatprep.subr.mxu0 0.0
    %1304 = vmatpush2.msra.mxu0 0.0
    %1305 = vmatprep.subr.mxu0 0.0
    %1306 = vmatpush2.msra.mxu0 0.0
    %1307 = vmatprep.subr.mxu0 0.0
    %1308 = vmatpush2.msra.mxu0 0.0
    %1309 = vmatprep.subr.mxu0 0.0
    %1310 = vmatpush2.msra.mxu0 0.0
    %1311 = vmatprep.subr.mxu0 0.0
    %1312 = vmatpush2.msra.mxu0 0.0
    %1313 = vmatprep.subr.mxu0 0.0
    %1314 = vmatpush2.msra.mxu0 0.0
    %1315 = vmatprep.subr.mxu0 0.0
    %1316 = vmatpush2.msra.mxu0 0.0
    %1317 = vmatprep.subr.mxu0 0.0
    %1318 = vmatpush2.msra.mxu0 0.0
    %1319 = vmatprep.subr.mxu0 0.0
    %1320 = vmatpush2.msra.mxu0 0.0
    %1321 = vmatprep.subr.mxu0 0.0
    %1322 = vmatpush2.msra.mxu0 0.0
    %1323 = vmatprep.subr.mxu0 0.0
    %1324 = vmatpush2.msra.mxu0 0.0
    %1325 = vmatprep.subr.mxu0 0.0
    %1326 = vmatpush2.msra.mxu0 0.0
    %1327 = vmatprep.subr.mxu0 0.0
    %1328 = vmatpush2.msra.mxu0 0.0
    %1329 = vmatprep.subr.mxu0 0.0
    %1330 = vmatpush2.msra.mxu0 0.0
    %1331 = vmatprep.subr.mxu0 0.0
    %1332 = vmatpush2.msra.mxu0 0.0
    %1333 = vmatprep.subr.mxu0 0.0
    %1334 = vmatpush2.msra.mxu0 0.0
    %1335 = vmatprep.mubr.f32.mxu0 0.0
    %1336 = vmatmul.mubr.f32.gmra.mxu0 %v1269
    %v1337 = vpop.f32.mrf.mxu0
    %v1338 = vadd.f32 %v1261, %v1337
    %v1339 = vpop.f32.mrf.mxu0
    %1340 = vdwg.mxu0
    %v1341 = vmax.f32 %v1338, 0.0
    %v1342 = vld [vmem:[#allocation13] sm:$0xff]
    %v1343 = vld [vmem:[#allocation13 + $0x8] sm:$0xff]
    %v1344 = vld [vmem:[#allocation13 + $0x10] sm:$0xff]
    %v1345 = vld [vmem:[#allocation13 + $0x18] sm:$0xff]
    %v1346 = vld [vmem:[#allocation13 + $0x20] sm:$0xff]
    %v1347 = vld [vmem:[#allocation13 + $0x28] sm:$0xff]
    %v1348 = vld [vmem:[#allocation13 + $0x30] sm:$0xff]
    %v1349 = vld [vmem:[#allocation13 + $0x38] sm:$0xff]
    %v1350 = vld [vmem:[#allocation13 + $0x40] sm:$0xff]
    %v1351 = vld [vmem:[#allocation13 + $0x48] sm:$0xff]
    %v1352 = vld [vmem:[#allocation13 + $0x50] sm:$0xff]
    %v1353 = vld [vmem:[#allocation13 + $0x58] sm:$0xff]
    %v1354 = vld [vmem:[#allocation13 + $0x60] sm:$0xff]
    %v1355 = vld [vmem:[#allocation13 + $0x68] sm:$0xff]
    %v1356 = vld [vmem:[#allocation13 + $0x70] sm:$0xff]
    %v1357 = vld [vmem:[#allocation13 + $0x78] sm:$0xff]
    %v1358 = vld [vmem:[#allocation15] sm:$0x1]
    %v1360 = vlaneseq
    %v1361 = vshrl.u32 %v1360, 7
    %v1362 = vsub.s32 0, %v1361
    %v1363 = vrot.slane %v1358, %v1362
    %1365 = vmatprep.subr.mxu0 0.0
    %1366 = vmatpush1.msra.mxu0 %v1357
    %1367 = vmatprep.subr.mxu0 0.0
    %1368 = vmatpush1.msra.mxu0 %v1356
    %1369 = vmatprep.subr.mxu0 0.0
    %1370 = vmatpush1.msra.mxu0 %v1355
    %1371 = vmatprep.subr.mxu0 0.0
    %1372 = vmatpush1.msra.mxu0 %v1354
    %1373 = vmatprep.subr.mxu0 0.0
    %1374 = vmatpush1.msra.mxu0 %v1353
    %1375 = vmatprep.subr.mxu0 0.0
    %1376 = vmatpush1.msra.mxu0 %v1352
    %1377 = vmatprep.subr.mxu0 0.0
    %1378 = vmatpush1.msra.mxu0 %v1351
    %1379 = vmatprep.subr.mxu0 0.0
    %1380 = vmatpush1.msra.mxu0 %v1350
    %1381 = vmatprep.subr.mxu0 0.0
    %1382 = vmatpush1.msra.mxu0 %v1349
    %1383 = vmatprep.subr.mxu0 0.0
    %1384 = vmatpush1.msra.mxu0 %v1348
    %1385 = vmatprep.subr.mxu0 0.0
    %1386 = vmatpush1.msra.mxu0 %v1347
    %1387 = vmatprep.subr.mxu0 0.0
    %1388 = vmatpush1.msra.mxu0 %v1346
    %1389 = vmatprep.subr.mxu0 0.0
    %1390 = vmatpush1.msra.mxu0 %v1345
    %1391 = vmatprep.subr.mxu0 0.0
    %1392 = vmatpush1.msra.mxu0 %v1344
    %1393 = vmatprep.subr.mxu0 0.0
    %1394 = vmatpush1.msra.mxu0 %v1343
    %1395 = vmatprep.subr.mxu0 0.0
    %1396 = vmatpush1.msra.mxu0 %v1342
    %1397 = vmatprep.subr.mxu0 0.0
    %1398 = vmatpush2.msra.mxu0 0.0
    %1399 = vmatprep.subr.mxu0 0.0
    %1400 = vmatpush2.msra.mxu0 0.0
    %1401 = vmatprep.subr.mxu0 0.0
    %1402 = vmatpush2.msra.mxu0 0.0
    %1403 = vmatprep.subr.mxu0 0.0
    %1404 = vmatpush2.msra.mxu0 0.0
    %1405 = vmatprep.subr.mxu0 0.0
    %1406 = vmatpush2.msra.mxu0 0.0
    %1407 = vmatprep.subr.mxu0 0.0
    %1408 = vmatpush2.msra.mxu0 0.0
    %1409 = vmatprep.subr.mxu0 0.0
    %1410 = vmatpush2.msra.mxu0 0.0
    %1411 = vmatprep.subr.mxu0 0.0
    %1412 = vmatpush2.msra.mxu0 0.0
    %1413 = vmatprep.subr.mxu0 0.0
    %1414 = vmatpush2.msra.mxu0 0.0
    %1415 = vmatprep.subr.mxu0 0.0
    %1416 = vmatpush2.msra.mxu0 0.0
    %1417 = vmatprep.subr.mxu0 0.0
    %1418 = vmatpush2.msra.mxu0 0.0
    %1419 = vmatprep.subr.mxu0 0.0
    %1420 = vmatpush2.msra.mxu0 0.0
    %1421 = vmatprep.subr.mxu0 0.0
    %1422 = vmatpush2.msra.mxu0 0.0
    %1423 = vmatprep.subr.mxu0 0.0
    %1424 = vmatpush2.msra.mxu0 0.0
    %1425 = vmatprep.subr.mxu0 0.0
    %1426 = vmatpush2.msra.mxu0 0.0
    %1427 = vmatprep.subr.mxu0 0.0
    %1428 = vmatpush2.msra.mxu0 0.0
    %1429 = vmatprep.mubr.f32.mxu0 0.0
    %1430 = vmatmul.mubr.f32.gmra.mxu0 %v1341
    %v1431 = vpop.f32.mrf.mxu0
    %v1432 = vadd.f32 %v1363, %v1431
    %v1433 = vpop.f32.mrf.mxu0
    %1434 = vdwg.mxu0
    %v1435 = vmax.f32 %v1432, 0.0
    %v1436 = vld [vmem:[%s12] sm:$0xff]
    %v1437 = vld [vmem:[%s12 + $0x8] sm:$0xff]
    %v1438 = vld [vmem:[%s12 + $0x10] sm:$0xff]
    %v1439 = vld [vmem:[%s12 + $0x18] sm:$0xff]
    %v1440 = vld [vmem:[%s12 + $0x20] sm:$0xff]
    %v1441 = vld [vmem:[%s12 + $0x28] sm:$0xff]
    %v1442 = vld [vmem:[%s12 + $0x30] sm:$0xff]
    %v1443 = vld [vmem:[%s12 + $0x38] sm:$0xff]
    %v1444 = vld [vmem:[%s12 + $0x40] sm:$0xff]
    %v1445 = vld [vmem:[%s12 + $0x48] sm:$0xff]
    %v1446 = vld [vmem:[%s12 + $0x50] sm:$0xff]
    %v1447 = vld [vmem:[%s12 + $0x58] sm:$0xff]
    %v1448 = vld [vmem:[%s12 + $0x60] sm:$0xff]
    %v1449 = vld [vmem:[%s12 + $0x68] sm:$0xff]
    %v1450 = vld [vmem:[%s12 + $0x70] sm:$0xff]
    %v1451 = vld [vmem:[%s12 + $0x78] sm:$0xff]
    %v1452 = vld [vmem:[#allocation16] sm:$0x1]
    %v1454 = vlaneseq
    %v1455 = vshrl.u32 %v1454, 7
    %v1456 = vsub.s32 0, %v1455
    %v1457 = vrot.slane %v1452, %v1456
    %1459 = vmatprep.subr.mxu0 0.0
    %1460 = vmatpush1.msra.mxu0 %v1451
    %1461 = vmatprep.subr.mxu0 0.0
    %1462 = vmatpush1.msra.mxu0 %v1450
    %1463 = vmatprep.subr.mxu0 0.0
    %1464 = vmatpush1.msra.mxu0 %v1449
    %1465 = vmatprep.subr.mxu0 0.0
    %1466 = vmatpush1.msra.mxu0 %v1448
    %1467 = vmatprep.subr.mxu0 0.0
    %1468 = vmatpush1.msra.mxu0 %v1447
    %1469 = vmatprep.subr.mxu0 0.0
    %1470 = vmatpush1.msra.mxu0 %v1446
    %1471 = vmatprep.subr.mxu0 0.0
    %1472 = vmatpush1.msra.mxu0 %v1445
    %1473 = vmatprep.subr.mxu0 0.0
    %1474 = vmatpush1.msra.mxu0 %v1444
    %1475 = vmatprep.subr.mxu0 0.0
    %1476 = vmatpush1.msra.mxu0 %v1443
    %1477 = vmatprep.subr.mxu0 0.0
    %1478 = vmatpush1.msra.mxu0 %v1442
    %1479 = vmatprep.subr.mxu0 0.0
    %1480 = vmatpush1.msra.mxu0 %v1441
    %1481 = vmatprep.subr.mxu0 0.0
    %1482 = vmatpush1.msra.mxu0 %v1440
    %1483 = vmatprep.subr.mxu0 0.0
    %1484 = vmatpush1.msra.mxu0 %v1439
    %1485 = vmatprep.subr.mxu0 0.0
    %1486 = vmatpush1.msra.mxu0 %v1438
    %1487 = vmatprep.subr.mxu0 0.0
    %1488 = vmatpush1.msra.mxu0 %v1437
    %1489 = vmatprep.subr.mxu0 0.0
    %1490 = vmatpush1.msra.mxu0 %v1436
    %1491 = vmatprep.subr.mxu0 0.0
    %1492 = vmatpush2.msra.mxu0 0.0
    %1493 = vmatprep.subr.mxu0 0.0
    %1494 = vmatpush2.msra.mxu0 0.0
    %1495 = vmatprep.subr.mxu0 0.0
    %1496 = vmatpush2.msra.mxu0 0.0
    %1497 = vmatprep.subr.mxu0 0.0
    %1498 = vmatpush2.msra.mxu0 0.0
    %1499 = vmatprep.subr.mxu0 0.0
    %1500 = vmatpush2.msra.mxu0 0.0
    %1501 = vmatprep.subr.mxu0 0.0
    %1502 = vmatpush2.msra.mxu0 0.0
    %1503 = vmatprep.subr.mxu0 0.0
    %1504 = vmatpush2.msra.mxu0 0.0
    %1505 = vmatprep.subr.mxu0 0.0
    %1506 = vmatpush2.msra.mxu0 0.0
    %1507 = vmatprep.subr.mxu0 0.0
    %1508 = vmatpush2.msra.mxu0 0.0
    %1509 = vmatprep.subr.mxu0 0.0
    %1510 = vmatpush2.msra.mxu0 0.0
    %1511 = vmatprep.subr.mxu0 0.0
    %1512 = vmatpush2.msra.mxu0 0.0
    %1513 = vmatprep.subr.mxu0 0.0
    %1514 = vmatpush2.msra.mxu0 0.0
    %1515 = vmatprep.subr.mxu0 0.0
    %1516 = vmatpush2.msra.mxu0 0.0
    %1517 = vmatprep.subr.mxu0 0.0
    %1518 = vmatpush2.msra.mxu0 0.0
    %1519 = vmatprep.subr.mxu0 0.0
    %1520 = vmatpush2.msra.mxu0 0.0
    %1521 = vmatprep.subr.mxu0 0.0
    %1522 = vmatpush2.msra.mxu0 0.0
    %1523 = vmatprep.mubr.f32.mxu0 0.0
    %1524 = vmatmul.mubr.f32.gmra.mxu0 %v1435
    %v1525 = vpop.f32.mrf.mxu0
    %v1526 = vadd.f32 %v1457, %v1525
    %v1527 = vpop.f32.mrf.mxu0
    %1528 = vdwg.mxu0
    %v1529 = vmax.f32 %v1526, 0.0
    %v1530 = vld [vmem:[#allocation18] sm:$0xff]
    %v1531 = vld [vmem:[#allocation18 + $0x8] sm:$0xff]
    %v1532 = vld [vmem:[#allocation18 + $0x10] sm:$0xff]
    %v1533 = vld [vmem:[#allocation18 + $0x18] sm:$0xff]
    %v1534 = vld [vmem:[#allocation18 + $0x20] sm:$0xff]
    %v1535 = vld [vmem:[#allocation18 + $0x28] sm:$0xff]
    %v1536 = vld [vmem:[#allocation18 + $0x30] sm:$0xff]
    %v1537 = vld [vmem:[#allocation18 + $0x38] sm:$0xff]
    %v1538 = vld [vmem:[#allocation18 + $0x40] sm:$0xff]
    %v1539 = vld [vmem:[#allocation18 + $0x48] sm:$0xff]
    %v1540 = vld [vmem:[#allocation18 + $0x50] sm:$0xff]
    %v1541 = vld [vmem:[#allocation18 + $0x58] sm:$0xff]
    %v1542 = vld [vmem:[#allocation18 + $0x60] sm:$0xff]
    %v1543 = vld [vmem:[#allocation18 + $0x68] sm:$0xff]
    %v1544 = vld [vmem:[#allocation18 + $0x70] sm:$0xff]
    %v1545 = vld [vmem:[#allocation18 + $0x78] sm:$0xff]
    %v1546 = vld [vmem:[#allocation19] sm:$0x1]
    %v1548 = vlaneseq
    %v1549 = vshrl.u32 %v1548, 7
    %v1550 = vsub.s32 0, %v1549
    %v1551 = vrot.slane %v1546, %v1550
    %1553 = vmatprep.subr.mxu0 0.0
    %1554 = vmatpush1.msra.mxu0 %v1545
    %1555 = vmatprep.subr.mxu0 0.0
    %1556 = vmatpush1.msra.mxu0 %v1544
    %1557 = vmatprep.subr.mxu0 0.0
    %1558 = vmatpush1.msra.mxu0 %v1543
    %1559 = vmatprep.subr.mxu0 0.0
    %1560 = vmatpush1.msra.mxu0 %v1542
    %1561 = vmatprep.subr.mxu0 0.0
    %1562 = vmatpush1.msra.mxu0 %v1541
    %1563 = vmatprep.subr.mxu0 0.0
    %1564 = vmatpush1.msra.mxu0 %v1540
    %1565 = vmatprep.subr.mxu0 0.0
    %1566 = vmatpush1.msra.mxu0 %v1539
    %1567 = vmatprep.subr.mxu0 0.0
    %1568 = vmatpush1.msra.mxu0 %v1538
    %1569 = vmatprep.subr.mxu0 0.0
    %1570 = vmatpush1.msra.mxu0 %v1537
    %1571 = vmatprep.subr.mxu0 0.0
    %1572 = vmatpush1.msra.mxu0 %v1536
    %1573 = vmatprep.subr.mxu0 0.0
    %1574 = vmatpush1.msra.mxu0 %v1535
    %1575 = vmatprep.subr.mxu0 0.0
    %1576 = vmatpush1.msra.mxu0 %v1534
    %1577 = vmatprep.subr.mxu0 0.0
    %1578 = vmatpush1.msra.mxu0 %v1533
    %1579 = vmatprep.subr.mxu0 0.0
    %1580 = vmatpush1.msra.mxu0 %v1532
    %1581 = vmatprep.subr.mxu0 0.0
    %1582 = vmatpush1.msra.mxu0 %v1531
    %1583 = vmatprep.subr.mxu0 0.0
    %1584 = vmatpush1.msra.mxu0 %v1530
    %1585 = vmatprep.subr.mxu0 0.0
    %1586 = vmatpush2.msra.mxu0 0.0
    %1587 = vmatprep.subr.mxu0 0.0
    %1588 = vmatpush2.msra.mxu0 0.0
    %1589 = vmatprep.subr.mxu0 0.0
    %1590 = vmatpush2.msra.mxu0 0.0
    %1591 = vmatprep.subr.mxu0 0.0
    %1592 = vmatpush2.msra.mxu0 0.0
    %1593 = vmatprep.subr.mxu0 0.0
    %1594 = vmatpush2.msra.mxu0 0.0
    %1595 = vmatprep.subr.mxu0 0.0
    %1596 = vmatpush2.msra.mxu0 0.0
    %1597 = vmatprep.subr.mxu0 0.0
    %1598 = vmatpush2.msra.mxu0 0.0
    %1599 = vmatprep.subr.mxu0 0.0
    %1600 = vmatpush2.msra.mxu0 0.0
    %1601 = vmatprep.subr.mxu0 0.0
    %1602 = vmatpush2.msra.mxu0 0.0
    %1603 = vmatprep.subr.mxu0 0.0
    %1604 = vmatpush2.msra.mxu0 0.0
    %1605 = vmatprep.subr.mxu0 0.0
    %1606 = vmatpush2.msra.mxu0 0.0
    %1607 = vmatprep.subr.mxu0 0.0
    %1608 = vmatpush2.msra.mxu0 0.0
    %1609 = vmatprep.subr.mxu0 0.0
    %1610 = vmatpush2.msra.mxu0 0.0
    %1611 = vmatprep.subr.mxu0 0.0
    %1612 = vmatpush2.msra.mxu0 0.0
    %1613 = vmatprep.subr.mxu0 0.0
    %1614 = vmatpush2.msra.mxu0 0.0
    %1615 = vmatprep.subr.mxu0 0.0
    %1616 = vmatpush2.msra.mxu0 0.0
    %1617 = vmatprep.mubr.f32.mxu0 0.0
    %1618 = vmatmul.mubr.f32.gmra.mxu0 %v1529
    %v1619 = vpop.f32.mrf.mxu0
    %v1620 = vadd.f32 %v1551, %v1619
    %v1621 = vpop.f32.mrf.mxu0
    %1622 = vdwg.mxu0
    %1623 = vst [vmem:[%s16] sm:$0xff] %v1620
    // Predicated region
    $region114: #{value_network_forward.1} parent=1 // pred_check
      _
    $region115: #{value_network_forward.1} parent=1 // pred_check_branch
      %1625 = sbr.rel (0) target = $region117
    $region116: #{value_network_forward.1} parent=1 // pred_region
      _
    $region117: #{value_network_forward.1} parent=1 // pred_fallthru
      _
    // Predicated region
    $region118: #{value_network_forward.1} parent=1 // pred_check
      _
    $region119: #{value_network_forward.1} parent=1 // pred_check_branch
      %1627 = sbr.rel (0) target = $region121
    $region120: #{value_network_forward.1} parent=1 // pred_region
      _
    $region121: #{value_network_forward.1} parent=1 // pred_fallthru
      _
    %1628 = vsyncpa [#allocation3], 1
    %1629 = vsyncpa [#allocation5], 1
    %1630 = vsyncpa [#allocation8], 1
    %1631 = vsyncpa [#allocation11], 1
    %1632 = vsyncpa [#allocation14], 1
    %1633 = vsyncpa [#allocation17], 1
    %1634 = vsyncpa [#allocation20], 1

</llo_original>
